<compile_context>
chip_gen: v5e
topology: v5e:2x2
jax: 0.10.0
libtpu: 0.0.40
codegen_flags: <defaults>
</compile_context>

<pallas_src>
import functools

import jax
import jax.numpy as jnp
from jax.experimental import pallas as pl
from jax.experimental.pallas import tpu as pltpu

# fix_config used by the synthetic module (training path).
FIX_CONFIG = {
    "input":  {"mode": "activation_in",  "qbit": 8, "momentum": 0.1},
    "weight": {"mode": "weight",         "qbit": 8},
    "output": {"mode": "activation_out", "qbit": 8, "momentum": 0.1},
}
TRAINING = True

_VMEM_LIMIT = 32 * 1024 * 1024  # explicit, safe on v5e/v6e/v7x


def _round_up(a, b):
    return ((a + b - 1) // b) * b


# ----------------------------- Pallas kernels ------------------------------

def _quantize_kernel(x_ref, s_ref, o_ref, *, thres):
    # q = round(clamp(x * inv_scale, -1, 1) * thres) * (scale / thres)
    # (divisions hoisted to wrapper: s_ref = [1/scale, scale/thres] in SMEM)
    inv_s = s_ref[0]
    step = s_ref[1]
    o_ref[...] = jnp.round(jnp.clip(x_ref[...] * inv_s, -1.0, 1.0) * thres) * step


def _fused_conv_kernel(p_ref, w_ref, b_ref, rsw_ref, s_ref, out_ref, *, thres, oc):
    """Fused per M-tile:
       q   = fake-quantize(patches tile)              (VPU, 2 muls + round)
       out = q @ w_pad + bias_pad                     (MXU, lane-dense N)
       pw  = sum_k q[m,k]^2 * rowsum|w|[k]            (VPU reduce, == row-sum of
                                                       the square-sum power conv)
       pw is written into spare output lane `oc` (padding lane)."""
    inv_s = s_ref[0]
    step = s_ref[1]
    q = jnp.round(jnp.clip(p_ref[...] * inv_s, -1.0, 1.0) * thres) * step
    acc = jnp.dot(q, w_ref[...], preferred_element_type=jnp.float32) + b_ref[...]
    pw = jnp.sum(q * q * rsw_ref[...], axis=1, keepdims=True)          # (tm, 1)
    lane = jax.lax.broadcasted_iota(jnp.int32, acc.shape, 1)
    out_ref[...] = jnp.where(lane == oc, pw, acc)


# ------------------------------- wrappers -----------------------------------

def _scale_consts(scale, thres):
    """[1/scale, scale/thres] as a (2,) f32 SMEM operand (with zero guard)."""
    s = jnp.asarray(scale, jnp.float32)
    safe = jnp.where(s != 0.0, s, jnp.float32(1.0))   # reference would emit nan here
    return jnp.stack([1.0 / safe, safe / jnp.float32(thres)]).astype(jnp.float32)


def quantize(x, scale, qbit, tr=512):
    """Elementwise fake-quantization (QuantizeFunction rounding), tiled & lane-dense."""
    thres = float(2 ** (qbit - 1) - 1)
    flat = x.reshape(-1).astype(jnp.float32)
    n = flat.shape[0]
    rows = _round_up((n + 127) // 128, 8)
    tr = min(tr, rows)
    rows_p = _round_up(rows, tr)
    xp = jnp.pad(flat, (0, rows_p * 128 - n)).reshape(rows_p, 128)
    out = pl.pallas_call(
        functools.partial(_quantize_kernel, thres=thres),
        out_shape=jax.ShapeDtypeStruct((rows_p, 128), jnp.float32),
        grid=(rows_p // tr,),
        in_specs=[
            pl.BlockSpec((tr, 128), lambda i: (i, 0)),
            pl.BlockSpec(memory_space=pltpu.MemorySpace.SMEM),   # [1/s, s/thres]
        ],
        out_specs=pl.BlockSpec((tr, 128), lambda i: (i, 0)),
        compiler_params=pltpu.CompilerParams(
            dimension_semantics=("parallel",), vmem_limit_bytes=_VMEM_LIMIT),
    )(xp, _scale_consts(scale, thres))
    return out.reshape(-1)[:n].reshape(x.shape)


def fused_conv_power(patches, w2d, bias, scale_in, qbit_in, tm=512):
    """Returns out2d of shape (Mp, round_up(OC+1,128)):
         out2d[:, :OC] = quantize(patches) @ w2d + bias       (main conv)
         out2d[:,  OC] = per-row power term sum_k q^2 * rowsum|w2d|
       (lane OC is an otherwise-padded lane, so the power path costs no extra
        MXU work or HBM output array)."""
    M, K = patches.shape
    OC = w2d.shape[1]
    thres = float(2 ** (qbit_in - 1) - 1)
    npad = _round_up(OC + 1, 128)                  # lane-dense output (+1 spare lane)
    tm_eff = min(tm, _round_up(M, 8))
    Mp = _round_up(M, tm_eff)

    p = jnp.pad(patches.astype(jnp.float32), ((0, Mp - M), (0, 0)))
    w32 = w2d.astype(jnp.float32)
    w_pad = jnp.pad(w32, ((0, 0), (0, npad - OC)))
    b_pad = jnp.pad(bias.astype(jnp.float32).reshape(1, OC), ((0, 0), (0, npad - OC)))
    rsw = jnp.sum(jnp.abs(w32), axis=1).reshape(1, K)      # precomputed rowsum|w|

    # TODO(synk): add a K grid axis ("arbitrary") with a VMEM accumulator for
    # very large C*KH*KW so tiles stay within v7x's 64 MiB VMEM.
    out = pl.pallas_call(
        functools.partial(_fused_conv_kernel, thres=thres, oc=OC),
        out_shape=jax.ShapeDtypeStruct((Mp, npad), jnp.float32),
        grid=(Mp // tm_eff,),
        in_specs=[
            pl.BlockSpec((tm_eff, K), lambda i: (i, 0)),
            pl.BlockSpec((K, npad), lambda i: (0, 0)),
            pl.BlockSpec((1, npad), lambda i: (0, 0)),
            pl.BlockSpec((1, K), lambda i: (0, 0)),
            pl.BlockSpec(memory_space=pltpu.MemorySpace.SMEM),  # [1/s_in, s_in/thres]
        ],
        out_specs=pl.BlockSpec((tm_eff, npad), lambda i: (i, 0)),
        compiler_params=pltpu.CompilerParams(
            dimension_semantics=("parallel",), vmem_limit_bytes=_VMEM_LIMIT),
    )(p, w_pad, b_pad, rsw, _scale_consts(scale_in, thres))
    return out


def im2col(x, kh, kw):
    """x: (B, C, H, W) NCHW -> patches (B*OH*OW, C*kh*kw) matching conv2d weight layout."""
    # TODO(synk): for large inputs the KH*KW im2col HBM expansion could be avoided
    # by fusing the window gather into the kernel; kept in JAX glue here.
    B, C, H, W = x.shape
    OH, OW = H - kh + 1, W - kw + 1
    cols = []
    for i in range(kh):
        for j in range(kw):
            cols.append(x[:, :, i:i + OH, j:j + OW])      # (B, C, OH, OW)
    patches = jnp.stack(cols, axis=2)                     # (B, C, kh*kw, OH, OW)
    patches = patches.transpose(0, 3, 4, 1, 2)            # (B, OH, OW, C, kh*kw)
    return patches.reshape(B * OH * OW, C * kh * kw), (B, OH, OW)


def quantize_power_conv2d_forward(x, weight, bias, last_value_input,
                                  last_value_output, power):
    """Training-mode forward of QuantizePowerConv2d.

    Returns (quantize_output, new_power, new_last_value_input, new_last_value_output),
    i.e. the module output plus the in-place mutations made functional.
    """
    in_cfg, w_cfg, out_cfg = FIX_CONFIG["input"], FIX_CONFIG["weight"], FIX_CONFIG["output"]

    # --- Quantize(input), mode='activation_in', training=True ---
    # (the elementwise fake-quantization itself is fused into the conv kernel;
    #  only the scale bookkeeping happens here.)
    new_lv_in = (in_cfg["momentum"] * last_value_input[0]
                 + (1.0 - in_cfg["momentum"]) * jnp.max(jnp.abs(x)))
    scale_in = new_lv_in
    power_scale = scale_in ** 2
    # (the reference asserts min(x/scale) >= 0; guaranteed here since x >= 0)

    # --- Quantize(weight), mode='weight' ---
    scale_w = jnp.max(jnp.abs(weight))
    q_w = quantize(weight, scale_w, w_cfg["qbit"])
    power_scale = power_scale * scale_w

    # --- conv2d as im2col matmul; input fake-quant + square-sum power reduction
    #     fused into the same Pallas kernel ---
    OC, C, KH, KW = weight.shape
    patches, (B, OH, OW) = im2col(x, KH, KW)          # raw x; quantized in-kernel
    M = B * OH * OW
    w2d = q_w.reshape(OC, C * KH * KW).T              # (C*KH*KW, OC)
    out2d = fused_conv_power(patches, w2d, bias, scale_in, in_cfg["qbit"])

    # --- power accumulation (training branch):
    #     power += sum(conv(q_in^2, |q_w|)) / power_scale
    #            = sum_m sum_k q^2[m,k] * rowsum|q_w|[k] / power_scale  (lane OC)
    new_power = power + jnp.sum(out2d[:M, OC]) / power_scale

    # --- Quantize(output), mode='activation_out', training=True ---
    out_valid = out2d[:M, :OC]                        # values identical to NCHW conv out
    new_lv_out = (out_cfg["momentum"] * last_value_output[0]
                  + (1.0 - out_cfg["momentum"])
                  * (3.0 * jnp.std(out_valid, ddof=1) + jnp.abs(jnp.mean(out_valid))))
    q_out2d = quantize(out2d, new_lv_out, out_cfg["qbit"])   # lane-dense slab, no transpose
    q_out = q_out2d[:M, :OC].reshape(B, OH, OW, OC).transpose(0, 3, 1, 2)   # NCHW

    # TODO(synk): eval-mode (training=False) bit-serial power-estimation loop not implemented.
    return q_out, new_power, new_lv_in.reshape(1), new_lv_out.reshape(1)


if __name__ == "__main__":
    key = jax.random.PRNGKey(0)
    kx, kw, kb = jax.random.split(key, 3)

    B, C, H, W = 2, 4, 16, 16
    OC, KH, KW = 8, 3, 3

    # activation_in mode requires non-negative inputs (post-ReLU activations).
    x = jnp.abs(jax.random.normal(kx, (B, C, H, W), jnp.float32))
    weight = 0.1 * jax.random.normal(kw, (OC, C, KH, KW), jnp.float32)
    bias = 0.1 * jax.random.normal(kb, (OC,), jnp.float32)
    last_value_input = jnp.zeros((1,), jnp.float32)
    last_value_output = jnp.zeros((1,), jnp.float32)
    power = jnp.zeros((), jnp.float32)

    fwd = jax.jit(quantize_power_conv2d_forward)
    q_out, new_power, lv_in, lv_out = fwd(x, weight, bias,
                                          last_value_input, last_value_output, power)
    jax.block_until_ready((q_out, new_power, lv_in, lv_out))
    assert q_out.shape == (B, OC, H - KH + 1, W - KW + 1)
    print("KERNEL_OK")
</pallas_src>

<mosaic_0001>
module attributes {stable_mosaic.version = 11 : i64} {
  func.func @_quantize_kernel(%arg0: i32, %arg1: memref<8x128xf32, #tpu.memory_space<vmem>>, %arg2: memref<2xf32, #tpu.memory_space<smem>>, %arg3: memref<8x128xf32, #tpu.memory_space<vmem>>) attributes {dimension_semantics = [#tpu.dimension_semantics<parallel>], iteration_bounds = array<i64: 1>, scalar_prefetch = 0 : i64, scratch_operands = 0 : i64, tpu.core_type = #tpu.core_type<tc>, window_params = [{transform_indices = @transform_0, window_bounds = array<i64: 8, 128>}, {transform_indices = @transform_1, window_bounds = array<i64: 2>}, {transform_indices = @transform_2, window_bounds = array<i64: 8, 128>}]} {
    %c0 = arith.constant 0 : index
    %0 = memref.load %arg2[%c0] : memref<2xf32, #tpu.memory_space<smem>>
    %c1 = arith.constant 1 : index
    %1 = memref.load %arg2[%c1] : memref<2xf32, #tpu.memory_space<smem>>
    %c0_0 = arith.constant 0 : index
    %c0_1 = arith.constant 0 : index
    %2 = vector.load %arg1[%c0_0, %c0_1] : memref<8x128xf32, #tpu.memory_space<vmem>>, vector<8x128xf32>
    %3 = vector.broadcast %0 : f32 to vector<8x128xf32>
    %4 = arith.mulf %2, %3 : vector<8x128xf32>
    %cst = arith.constant -1.000000e+00 : f32
    %cst_2 = arith.constant 1.000000e+00 : f32
    %5 = vector.broadcast %cst : f32 to vector<8x128xf32>
    %6 = arith.maximumf %5, %4 : vector<8x128xf32>
    %7 = vector.broadcast %cst_2 : f32 to vector<8x128xf32>
    %8 = arith.minimumf %7, %6 : vector<8x128xf32>
    %cst_3 = arith.constant 1.270000e+02 : f32
    %9 = vector.broadcast %cst_3 : f32 to vector<8x128xf32>
    %10 = arith.mulf %8, %9 : vector<8x128xf32>
    %11 = math.roundeven %10 : vector<8x128xf32>
    %12 = vector.broadcast %1 : f32 to vector<8x128xf32>
    %13 = arith.mulf %11, %12 : vector<8x128xf32>
    %c0_4 = arith.constant 0 : index
    %c0_5 = arith.constant 0 : index
    %14 = vector.load %arg3[%c0_4, %c0_5] : memref<8x128xf32, #tpu.memory_space<vmem>>, vector<8x128xf32>
    tpu.vector_store %arg3[%c0_4, %c0_5], %13 {strides = array<i32>} : memref<8x128xf32, #tpu.memory_space<vmem>>, vector<8x128xf32>,
    return
  }
  func.func @transform_0(%arg0: i32) -> (i32, i32) {
    %c0_i32 = arith.constant 0 : i32
    %c0_i32_0 = arith.constant 0 : i32
    return %arg0, %c0_i32 : i32, i32
  }
  func.func @transform_1(%arg0: i32) -> i32 {
    %c0_i32 = arith.constant 0 : i32
    %c0_i32_0 = arith.constant 0 : i32
    return %c0_i32 : i32
  }
  func.func @transform_2(%arg0: i32) -> (i32, i32) {
    %c0_i32 = arith.constant 0 : i32
    %c0_i32_0 = arith.constant 0 : i32
    return %arg0, %c0_i32 : i32, i32
  }
}

module attributes {stable_mosaic.version = 11 : i64} {
  func.func @_fused_conv_kernel(%arg0: i32, %arg1: memref<392x36xf32, #tpu.memory_space<vmem>>, %arg2: memref<36x128xf32, #tpu.memory_space<vmem>>, %arg3: memref<1x128xf32, #tpu.memory_space<vmem>>, %arg4: memref<1x36xf32, #tpu.memory_space<vmem>>, %arg5: memref<2xf32, #tpu.memory_space<smem>>, %arg6: memref<392x128xf32, #tpu.memory_space<vmem>>) attributes {dimension_semantics = [#tpu.dimension_semantics<parallel>], iteration_bounds = array<i64: 1>, scalar_prefetch = 0 : i64, scratch_operands = 0 : i64, tpu.core_type = #tpu.core_type<tc>, window_params = [{transform_indices = @transform_0, window_bounds = array<i64: 392, 36>}, {pipeline_mode = #tpu.pipeline_mode<synchronous>, transform_indices = @transform_1, window_bounds = array<i64: 36, 128>}, {pipeline_mode = #tpu.pipeline_mode<synchronous>, transform_indices = @transform_2, window_bounds = array<i64: 1, 128>}, {pipeline_mode = #tpu.pipeline_mode<synchronous>, transform_indices = @transform_3, window_bounds = array<i64: 1, 36>}, {transform_indices = @transform_4, window_bounds = array<i64: 2>}, {transform_indices = @transform_5, window_bounds = array<i64: 392, 128>}]} {
    %c0 = arith.constant 0 : index
    %0 = memref.load %arg5[%c0] : memref<2xf32, #tpu.memory_space<smem>>
    %c1 = arith.constant 1 : index
    %1 = memref.load %arg5[%c1] : memref<2xf32, #tpu.memory_space<smem>>
    %c0_0 = arith.constant 0 : index
    %c0_1 = arith.constant 0 : index
    %2 = vector.load %arg1[%c0_0, %c0_1] : memref<392x36xf32, #tpu.memory_space<vmem>>, vector<392x36xf32>
    %3 = vector.broadcast %0 : f32 to vector<392x36xf32>
    %4 = arith.mulf %2, %3 : vector<392x36xf32>
    %cst = arith.constant -1.000000e+00 : f32
    %cst_2 = arith.constant 1.000000e+00 : f32
    %5 = vector.broadcast %cst : f32 to vector<392x36xf32>
    %6 = arith.maximumf %5, %4 : vector<392x36xf32>
    %7 = vector.broadcast %cst_2 : f32 to vector<392x36xf32>
    %8 = arith.minimumf %7, %6 : vector<392x36xf32>
    %cst_3 = arith.constant 1.270000e+02 : f32
    %9 = vector.broadcast %cst_3 : f32 to vector<392x36xf32>
    %10 = arith.mulf %8, %9 : vector<392x36xf32>
    %11 = math.roundeven %10 : vector<392x36xf32>
    %12 = vector.broadcast %1 : f32 to vector<392x36xf32>
    %13 = arith.mulf %11, %12 : vector<392x36xf32>
    %c0_4 = arith.constant 0 : index
    %c0_5 = arith.constant 0 : index
    %14 = vector.load %arg2[%c0_4, %c0_5] : memref<36x128xf32, #tpu.memory_space<vmem>>, vector<36x128xf32>
    %cst_6 = arith.constant dense<0.000000e+00> : vector<392x128xf32>
    %15 = tpu.matmul %13, %14, %cst_6 {dimension_numbers = #tpu.dot_dimension_numbers<[1], [0], [0], [1], [0, 0, 1, 1], [], []>} : vector<392x36xf32>, vector<36x128xf32>, vector<392x128xf32> -> vector<392x128xf32>
    %c0_7 = arith.constant 0 : index
    %c0_8 = arith.constant 0 : index
    %16 = vector.load %arg3[%c0_7, %c0_8] : memref<1x128xf32, #tpu.memory_space<vmem>>, vector<1x128xf32>
    %17 = vector.broadcast %16 : vector<1x128xf32> to vector<392x128xf32>
    %18 = arith.addf %15, %17 : vector<392x128xf32>
    %19 = arith.mulf %13, %13 : vector<392x36xf32>
    %c0_9 = arith.constant 0 : index
    %c0_10 = arith.constant 0 : index
    %20 = vector.load %arg4[%c0_9, %c0_10] : memref<1x36xf32, #tpu.memory_space<vmem>>, vector<1x36xf32>
    %21 = vector.broadcast %20 : vector<1x36xf32> to vector<392x36xf32>
    %22 = arith.mulf %19, %21 : vector<392x36xf32>
    %cst_11 = arith.constant dense<0.000000e+00> : vector<392xf32>
    %23 = vector.multi_reduction <add>, %22, %cst_11 [1] : vector<392x36xf32> to vector<392xf32>
    %24 = vector.shape_cast %23 : vector<392xf32> to vector<392x1xf32>
    %25 = tpu.iota {dimensions = array<i32: 1>} : vector<392x128xi32>
    %c8_i32 = arith.constant 8 : i32
    %26 = vector.broadcast %c8_i32 : i32 to vector<392x128xi32>
    %27 = arith.cmpi eq, %25, %26 : vector<392x128xi32>
    %28 = vector.shape_cast %24 : vector<392x1xf32> to vector<392x1xf32>
    %29 = vector.broadcast %28 : vector<392x1xf32> to vector<392x128xf32>
    %30 = arith.select %27, %29, %18 : vector<392x128xi1>, vector<392x128xf32>
    %c0_12 = arith.constant 0 : index
    %c0_13 = arith.constant 0 : index
    %31 = vector.load %arg6[%c0_12, %c0_13] : memref<392x128xf32, #tpu.memory_space<vmem>>, vector<392x128xf32>
    tpu.vector_store %arg6[%c0_12, %c0_13], %30 {strides = array<i32>} : memref<392x128xf32, #tpu.memory_space<vmem>>, vector<392x128xf32>,
    return
  }
  func.func @transform_0(%arg0: i32) -> (i32, i32) {
    %c0_i32 = arith.constant 0 : i32
    %c0_i32_0 = arith.constant 0 : i32
    return %arg0, %c0_i32 : i32, i32
  }
  func.func @transform_1(%arg0: i32) -> (i32, i32) {
    %c0_i32 = arith.constant 0 : i32
    %c0_i32_0 = arith.constant 0 : i32
    %c0_i32_1 = arith.constant 0 : i32
    return %c0_i32, %c0_i32_0 : i32, i32
  }
  func.func @transform_2(%arg0: i32) -> (i32, i32) {
    %c0_i32 = arith.constant 0 : i32
    %c0_i32_0 = arith.constant 0 : i32
    %c0_i32_1 = arith.constant 0 : i32
    return %c0_i32, %c0_i32_0 : i32, i32
  }
  func.func @transform_3(%arg0: i32) -> (i32, i32) {
    %c0_i32 = arith.constant 0 : i32
    %c0_i32_0 = arith.constant 0 : i32
    %c0_i32_1 = arith.constant 0 : i32
    return %c0_i32, %c0_i32_0 : i32, i32
  }
  func.func @transform_4(%arg0: i32) -> i32 {
    %c0_i32 = arith.constant 0 : i32
    %c0_i32_0 = arith.constant 0 : i32
    return %c0_i32 : i32
  }
  func.func @transform_5(%arg0: i32) -> (i32, i32) {
    %c0_i32 = arith.constant 0 : i32
    %c0_i32_0 = arith.constant 0 : i32
    return %arg0, %c0_i32 : i32, i32
  }
}

module attributes {stable_mosaic.version = 11 : i64} {
  func.func @_quantize_kernel(%arg0: i32, %arg1: memref<392x128xf32, #tpu.memory_space<vmem>>, %arg2: memref<2xf32, #tpu.memory_space<smem>>, %arg3: memref<392x128xf32, #tpu.memory_space<vmem>>) attributes {dimension_semantics = [#tpu.dimension_semantics<parallel>], iteration_bounds = array<i64: 1>, scalar_prefetch = 0 : i64, scratch_operands = 0 : i64, tpu.core_type = #tpu.core_type<tc>, window_params = [{transform_indices = @transform_0, window_bounds = array<i64: 392, 128>}, {transform_indices = @transform_1, window_bounds = array<i64: 2>}, {transform_indices = @transform_2, window_bounds = array<i64: 392, 128>}]} {
    %c0 = arith.constant 0 : index
    %0 = memref.load %arg2[%c0] : memref<2xf32, #tpu.memory_space<smem>>
    %c1 = arith.constant 1 : index
    %1 = memref.load %arg2[%c1] : memref<2xf32, #tpu.memory_space<smem>>
    %c0_0 = arith.constant 0 : index
    %c0_1 = arith.constant 0 : index
    %2 = vector.load %arg1[%c0_0, %c0_1] : memref<392x128xf32, #tpu.memory_space<vmem>>, vector<392x128xf32>
    %3 = vector.broadcast %0 : f32 to vector<392x128xf32>
    %4 = arith.mulf %2, %3 : vector<392x128xf32>
    %cst = arith.constant -1.000000e+00 : f32
    %cst_2 = arith.constant 1.000000e+00 : f32
    %5 = vector.broadcast %cst : f32 to vector<392x128xf32>
    %6 = arith.maximumf %5, %4 : vector<392x128xf32>
    %7 = vector.broadcast %cst_2 : f32 to vector<392x128xf32>
    %8 = arith.minimumf %7, %6 : vector<392x128xf32>
    %cst_3 = arith.constant 1.270000e+02 : f32
    %9 = vector.broadcast %cst_3 : f32 to vector<392x128xf32>
    %10 = arith.mulf %8, %9 : vector<392x128xf32>
    %11 = math.roundeven %10 : vector<392x128xf32>
    %12 = vector.broadcast %1 : f32 to vector<392x128xf32>
    %13 = arith.mulf %11, %12 : vector<392x128xf32>
    %c0_4 = arith.constant 0 : index
    %c0_5 = arith.constant 0 : index
    %14 = vector.load %arg3[%c0_4, %c0_5] : memref<392x128xf32, #tpu.memory_space<vmem>>, vector<392x128xf32>
    tpu.vector_store %arg3[%c0_4, %c0_5], %13 {strides = array<i32>} : memref<392x128xf32, #tpu.memory_space<vmem>>, vector<392x128xf32>,
    return
  }
  func.func @transform_0(%arg0: i32) -> (i32, i32) {
    %c0_i32 = arith.constant 0 : i32
    %c0_i32_0 = arith.constant 0 : i32
    return %arg0, %c0_i32 : i32, i32
  }
  func.func @transform_1(%arg0: i32) -> i32 {
    %c0_i32 = arith.constant 0 : i32
    %c0_i32_0 = arith.constant 0 : i32
    return %c0_i32 : i32
  }
  func.func @transform_2(%arg0: i32) -> (i32, i32) {
    %c0_i32 = arith.constant 0 : i32
    %c0_i32_0 = arith.constant 0 : i32
    return %arg0, %c0_i32 : i32, i32
  }
}

</mosaic_0001>

<llo_original>
// kernel: quantize_power_conv2d_forward.3
$region0: #{quantize_power_conv2d_forward.3}
  #allocation0 [shape = 'u32[]', space=smem, size = 0x4, offset = 0x4, fixed_abs, tag = 'smem constant byte address 0x4 - core index']
  #allocation1 [shape = 'u32[72,128]{1,0:T(1,128)}', space=vmem, size = 0x9000, scoped, tag = 'internal scratch']
  %s0 = inlined_call_operand.vmem [shape: f32[8,128], index: 0, kind: input, shape index: {}]
  %s1 = inlined_call_operand.vmem [shape: f32[2], index: 1, kind: input, shape index: {}]
  %s2 = inlined_call_operand.vmem [shape: f32[8,128], index: 2, kind: output, shape index: {}]
  %s3 = sld [smem:[#allocation0]]
  $region22: #{quantize_power_conv2d_forward.3} parent=0
    _
  %s5 = ssub.s32 1, %s3
  %s6 = scalar_select 0, %s5, %s3
  $region1: #{quantize_power_conv2d_forward.3} parent=0
    #allocation2 [shape = 'u8[512]{0}', space=smem, size = 0x200, scoped, tag = 'input window, operand 1, single buffered']
    #allocation3 [shape = 's32[1]{0}', space=sflag, size = 0x4, scoped, tag = 'scoped memory for quantize_power_conv2d_forward.3']
    %7 = vsyncpa [#allocation3], 0
    // Predicated region
    $region2: #{quantize_power_conv2d_forward.3} parent=1 // pred_check
      _
    $region3: #{quantize_power_conv2d_forward.3} parent=1 // pred_check_branch
      %9 = sbr.rel (0) target = $region5
    $region4: #{quantize_power_conv2d_forward.3} parent=1 // pred_region
      _
    $region5: #{quantize_power_conv2d_forward.3} parent=1 // pred_fallthru
      _
    // Predicated region
    $region6: #{quantize_power_conv2d_forward.3} parent=1 // pred_check
      _
    $region7: #{quantize_power_conv2d_forward.3} parent=1 // pred_check_branch
      %11 = sbr.rel (0) target = $region9
    $region8: #{quantize_power_conv2d_forward.3} parent=1 // pred_region
      %13 = vsyncadd [#allocation3], 0
      %s15 = sshll.u32 %s1, 4
      %s16 = int_to_ptr.vmem [resolvable:$true] %s15
      %18 = dma.vmem_to_smem %s16, 16, [#allocation2], [#allocation3]
    $region9: #{quantize_power_conv2d_forward.3} parent=1 // pred_fallthru
      _
    // Predicated region
    $region10: #{quantize_power_conv2d_forward.3} parent=1 // pred_check
      _
    $region11: #{quantize_power_conv2d_forward.3} parent=1 // pred_check_branch
      %20 = sbr.rel (0) target = $region13
    $region12: #{quantize_power_conv2d_forward.3} parent=1 // pred_region
      %22 = dma.done [#allocation3], 16
    $region13: #{quantize_power_conv2d_forward.3} parent=1 // pred_fallthru
      _
    %23 = sfence
    %s24 = sld [smem:[#allocation2]]
    %s25 = sld [smem:[#allocation2 + $0x1]]
    %v26 = vld [vmem:[%s0] sm:$0xff]
    %v27 = vstv %s24
    %v28 = vmul.f32 %v26, %v27
    %v29 = vmax.f32 %v28, -1.0
    %v30 = vmin.f32 %v29, 1.0
    %v31 = vmul.f32 %v30, 127.0
    %v32 = vround.ne.pseudo %v31
    %v33 = vstv %s25
    %v34 = vmul.f32 %v32, %v33
    %35 = vst [vmem:[%s2] sm:$0xff] %v34
    // Predicated region
    $region14: #{quantize_power_conv2d_forward.3} parent=1 // pred_check
      _
    $region15: #{quantize_power_conv2d_forward.3} parent=1 // pred_check_branch
      %37 = sbr.rel (0) target = $region17
    $region16: #{quantize_power_conv2d_forward.3} parent=1 // pred_region
      _
    $region17: #{quantize_power_conv2d_forward.3} parent=1 // pred_fallthru
      _
    // Predicated region
    $region18: #{quantize_power_conv2d_forward.3} parent=1 // pred_check
      _
    $region19: #{quantize_power_conv2d_forward.3} parent=1 // pred_check_branch
      %39 = sbr.rel (0) target = $region21
    $region20: #{quantize_power_conv2d_forward.3} parent=1 // pred_region
      _
    $region21: #{quantize_power_conv2d_forward.3} parent=1 // pred_fallthru
      _
    %40 = vsyncpa [#allocation3], 1

// kernel: quantize_power_conv2d_forward.4
$region0: #{quantize_power_conv2d_forward.4}
  #allocation0 [shape = 'u32[]', space=smem, size = 0x4, offset = 0x4, fixed_abs, tag = 'smem constant byte address 0x4 - core index']
  #allocation1 [shape = 'u32[72,128]{1,0:T(1,128)}', space=vmem, size = 0x9000, scoped, tag = 'internal scratch']
  %s0 = inlined_call_operand.vmem [shape: f32[392,36], index: 0, kind: input, shape index: {}]
  %s1 = inlined_call_operand.vmem [shape: f32[36,128], index: 1, kind: input, shape index: {}]
  %s2 = inlined_call_operand.vmem [shape: f32[1,128], index: 2, kind: input, shape index: {}]
  %s3 = inlined_call_operand.vmem [shape: f32[1,36], index: 3, kind: input, shape index: {}]
  %s4 = inlined_call_operand.vmem [shape: f32[2], index: 4, kind: input, shape index: {}]
  %s5 = inlined_call_operand.vmem [shape: f32[392,128], index: 5, kind: output, shape index: {}]
  %s6 = sld [smem:[#allocation0]]
  $region34: #{quantize_power_conv2d_forward.4} parent=0
    _
  %s8 = ssub.s32 1, %s6
  %s9 = scalar_select 0, %s8, %s6
  $region1: #{quantize_power_conv2d_forward.4} parent=0
    #allocation2 [shape = 'u8[512]{0}', space=smem, size = 0x200, scoped, tag = 'input window, operand 4, single buffered']
    #allocation3 [shape = 's32[1]{0}', space=sflag, size = 0x4, scoped, tag = 'scoped memory for quantize_power_conv2d_forward.4']
    %10 = vsyncpa [#allocation3], 0
    // Predicated region
    $region2: #{quantize_power_conv2d_forward.4} parent=1 // pred_check
      _
    $region3: #{quantize_power_conv2d_forward.4} parent=1 // pred_check_branch
      %12 = sbr.rel (0) target = $region5
    $region4: #{quantize_power_conv2d_forward.4} parent=1 // pred_region
      _
    $region5: #{quantize_power_conv2d_forward.4} parent=1 // pred_fallthru
      _
    // Predicated region
    $region6: #{quantize_power_conv2d_forward.4} parent=1 // pred_check
      _
    $region7: #{quantize_power_conv2d_forward.4} parent=1 // pred_check_branch
      %14 = sbr.rel (0) target = $region9
    $region8: #{quantize_power_conv2d_forward.4} parent=1 // pred_region
      _
    $region9: #{quantize_power_conv2d_forward.4} parent=1 // pred_fallthru
      _
    // Predicated region
    $region10: #{quantize_power_conv2d_forward.4} parent=1 // pred_check
      _
    $region11: #{quantize_power_conv2d_forward.4} parent=1 // pred_check_branch
      %16 = sbr.rel (0) target = $region13
    $region12: #{quantize_power_conv2d_forward.4} parent=1 // pred_region
      _
    $region13: #{quantize_power_conv2d_forward.4} parent=1 // pred_fallthru
      _
    // Predicated region
    $region14: #{quantize_power_conv2d_forward.4} parent=1 // pred_check
      _
    $region15: #{quantize_power_conv2d_forward.4} parent=1 // pred_check_branch
      %18 = sbr.rel (0) target = $region17
    $region16: #{quantize_power_conv2d_forward.4} parent=1 // pred_region
      _
    $region17: #{quantize_power_conv2d_forward.4} parent=1 // pred_fallthru
      _
    // Predicated region
    $region18: #{quantize_power_conv2d_forward.4} parent=1 // pred_check
      _
    $region19: #{quantize_power_conv2d_forward.4} parent=1 // pred_check_branch
      %20 = sbr.rel (0) target = $region21
    $region20: #{quantize_power_conv2d_forward.4} parent=1 // pred_region
      %22 = vsyncadd [#allocation3], 0
      %s24 = sshll.u32 %s4, 4
      %s25 = int_to_ptr.vmem [resolvable:$true] %s24
      %27 = dma.vmem_to_smem %s25, 16, [#allocation2], [#allocation3]
    $region21: #{quantize_power_conv2d_forward.4} parent=1 // pred_fallthru
      _
    // Predicated region
    $region22: #{quantize_power_conv2d_forward.4} parent=1 // pred_check
      _
    $region23: #{quantize_power_conv2d_forward.4} parent=1 // pred_check_branch
      %29 = sbr.rel (0) target = $region25
    $region24: #{quantize_power_conv2d_forward.4} parent=1 // pred_region
      %31 = dma.done [#allocation3], 16
    $region25: #{quantize_power_conv2d_forward.4} parent=1 // pred_fallthru
      _
    %32 = sfence
    %s33 = sld [smem:[#allocation2]]
    %s34 = sld [smem:[#allocation2 + $0x1]]
    %v35 = vld [vmem:[%s0] sm:$0xff]
    %v36 = vld [vmem:[%s0 + $0x8] sm:$0xff]
    %v37 = vld [vmem:[%s0 + $0x10] sm:$0xff]
    %v38 = vld [vmem:[%s0 + $0x18] sm:$0xff]
    %v39 = vld [vmem:[%s0 + $0x20] sm:$0xff]
    %v40 = vld [vmem:[%s0 + $0x28] sm:$0xff]
    %v41 = vld [vmem:[%s0 + $0x30] sm:$0xff]
    %v42 = vld [vmem:[%s0 + $0x38] sm:$0xff]
    %v43 = vld [vmem:[%s0 + $0x40] sm:$0xff]
    %v44 = vld [vmem:[%s0 + $0x48] sm:$0xff]
    %v45 = vld [vmem:[%s0 + $0x50] sm:$0xff]
    %v46 = vld [vmem:[%s0 + $0x58] sm:$0xff]
    %v47 = vld [vmem:[%s0 + $0x60] sm:$0xff]
    %v48 = vld [vmem:[%s0 + $0x68] sm:$0xff]
    %v49 = vld [vmem:[%s0 + $0x70] sm:$0xff]
    %v50 = vld [vmem:[%s0 + $0x78] sm:$0xff]
    %v51 = vld [vmem:[%s0 + $0x80] sm:$0xff]
    %v52 = vld [vmem:[%s0 + $0x88] sm:$0xff]
    %v53 = vld [vmem:[%s0 + $0x90] sm:$0xff]
    %v54 = vld [vmem:[%s0 + $0x98] sm:$0xff]
    %v55 = vld [vmem:[%s0 + $0xa0] sm:$0xff]
    %v56 = vld [vmem:[%s0 + $0xa8] sm:$0xff]
    %v57 = vld [vmem:[%s0 + $0xb0] sm:$0xff]
    %v58 = vld [vmem:[%s0 + $0xb8] sm:$0xff]
    %v59 = vld [vmem:[%s0 + $0xc0] sm:$0xff]
    %v60 = vld [vmem:[%s0 + $0xc8] sm:$0xff]
    %v61 = vld [vmem:[%s0 + $0xd0] sm:$0xff]
    %v62 = vld [vmem:[%s0 + $0xd8] sm:$0xff]
    %v63 = vld [vmem:[%s0 + $0xe0] sm:$0xff]
    %v64 = vld [vmem:[%s0 + $0xe8] sm:$0xff]
    %v65 = vld [vmem:[%s0 + $0xf0] sm:$0xff]
    %v66 = vld [vmem:[%s0 + $0xf8] sm:$0xff]
    %v67 = vld [vmem:[%s0 + $0x100] sm:$0xff]
    %v68 = vld [vmem:[%s0 + $0x108] sm:$0xff]
    %v69 = vld [vmem:[%s0 + $0x110] sm:$0xff]
    %v70 = vld [vmem:[%s0 + $0x118] sm:$0xff]
    %v71 = vld [vmem:[%s0 + $0x120] sm:$0xff]
    %v72 = vld [vmem:[%s0 + $0x128] sm:$0xff]
    %v73 = vld [vmem:[%s0 + $0x130] sm:$0xff]
    %v74 = vld [vmem:[%s0 + $0x138] sm:$0xff]
    %v75 = vld [vmem:[%s0 + $0x140] sm:$0xff]
    %v76 = vld [vmem:[%s0 + $0x148] sm:$0xff]
    %v77 = vld [vmem:[%s0 + $0x150] sm:$0xff]
    %v78 = vld [vmem:[%s0 + $0x158] sm:$0xff]
    %v79 = vld [vmem:[%s0 + $0x160] sm:$0xff]
    %v80 = vld [vmem:[%s0 + $0x168] sm:$0xff]
    %v81 = vld [vmem:[%s0 + $0x170] sm:$0xff]
    %v82 = vld [vmem:[%s0 + $0x178] sm:$0xff]
    %v83 = vld [vmem:[%s0 + $0x180] sm:$0xff]
    %v84 = vstv %s33
    %v85 = vmul.f32 %v35, %v84
    %v86 = vmul.f32 %v36, %v84
    %v87 = vmul.f32 %v37, %v84
    %v88 = vmul.f32 %v38, %v84
    %v89 = vmul.f32 %v39, %v84
    %v90 = vmul.f32 %v40, %v84
    %v91 = vmul.f32 %v41, %v84
    %v92 = vmul.f32 %v42, %v84
    %v93 = vmul.f32 %v43, %v84
    %v94 = vmul.f32 %v44, %v84
    %v95 = vmul.f32 %v45, %v84
    %v96 = vmul.f32 %v46, %v84
    %v97 = vmul.f32 %v47, %v84
    %v98 = vmul.f32 %v48, %v84
    %v99 = vmul.f32 %v49, %v84
    %v100 = vmul.f32 %v50, %v84
    %v101 = vmul.f32 %v51, %v84
    %v102 = vmul.f32 %v52, %v84
    %v103 = vmul.f32 %v53, %v84
    %v104 = vmul.f32 %v54, %v84
    %v105 = vmul.f32 %v55, %v84
    %v106 = vmul.f32 %v56, %v84
    %v107 = vmul.f32 %v57, %v84
    %v108 = vmul.f32 %v58, %v84
    %v109 = vmul.f32 %v59, %v84
    %v110 = vmul.f32 %v60, %v84
    %v111 = vmul.f32 %v61, %v84
    %v112 = vmul.f32 %v62, %v84
    %v113 = vmul.f32 %v63, %v84
    %v114 = vmul.f32 %v64, %v84
    %v115 = vmul.f32 %v65, %v84
    %v116 = vmul.f32 %v66, %v84
    %v117 = vmul.f32 %v67, %v84
    %v118 = vmul.f32 %v68, %v84
    %v119 = vmul.f32 %v69, %v84
    %v120 = vmul.f32 %v70, %v84
    %v121 = vmul.f32 %v71, %v84
    %v122 = vmul.f32 %v72, %v84
    %v123 = vmul.f32 %v73, %v84
    %v124 = vmul.f32 %v74, %v84
    %v125 = vmul.f32 %v75, %v84
    %v126 = vmul.f32 %v76, %v84
    %v127 = vmul.f32 %v77, %v84
    %v128 = vmul.f32 %v78, %v84
    %v129 = vmul.f32 %v79, %v84
    %v130 = vmul.f32 %v80, %v84
    %v131 = vmul.f32 %v81, %v84
    %v132 = vmul.f32 %v82, %v84
    %v133 = vmul.f32 %v83, %v84
    %v134 = vmax.f32 %v85, -1.0
    %v135 = vmax.f32 %v86, -1.0
    %v136 = vmax.f32 %v87, -1.0
    %v137 = vmax.f32 %v88, -1.0
    %v138 = vmax.f32 %v89, -1.0
    %v139 = vmax.f32 %v90, -1.0
    %v140 = vmax.f32 %v91, -1.0
    %v141 = vmax.f32 %v92, -1.0
    %v142 = vmax.f32 %v93, -1.0
    %v143 = vmax.f32 %v94, -1.0
    %v144 = vmax.f32 %v95, -1.0
    %v145 = vmax.f32 %v96, -1.0
    %v146 = vmax.f32 %v97, -1.0
    %v147 = vmax.f32 %v98, -1.0
    %v148 = vmax.f32 %v99, -1.0
    %v149 = vmax.f32 %v100, -1.0
    %v150 = vmax.f32 %v101, -1.0
    %v151 = vmax.f32 %v102, -1.0
    %v152 = vmax.f32 %v103, -1.0
    %v153 = vmax.f32 %v104, -1.0
    %v154 = vmax.f32 %v105, -1.0
    %v155 = vmax.f32 %v106, -1.0
    %v156 = vmax.f32 %v107, -1.0
    %v157 = vmax.f32 %v108, -1.0
    %v158 = vmax.f32 %v109, -1.0
    %v159 = vmax.f32 %v110, -1.0
    %v160 = vmax.f32 %v111, -1.0
    %v161 = vmax.f32 %v112, -1.0
    %v162 = vmax.f32 %v113, -1.0
    %v163 = vmax.f32 %v114, -1.0
    %v164 = vmax.f32 %v115, -1.0
    %v165 = vmax.f32 %v116, -1.0
    %v166 = vmax.f32 %v117, -1.0
    %v167 = vmax.f32 %v118, -1.0
    %v168 = vmax.f32 %v119, -1.0
    %v169 = vmax.f32 %v120, -1.0
    %v170 = vmax.f32 %v121, -1.0
    %v171 = vmax.f32 %v122, -1.0
    %v172 = vmax.f32 %v123, -1.0
    %v173 = vmax.f32 %v124, -1.0
    %v174 = vmax.f32 %v125, -1.0
    %v175 = vmax.f32 %v126, -1.0
    %v176 = vmax.f32 %v127, -1.0
    %v177 = vmax.f32 %v128, -1.0
    %v178 = vmax.f32 %v129, -1.0
    %v179 = vmax.f32 %v130, -1.0
    %v180 = vmax.f32 %v131, -1.0
    %v181 = vmax.f32 %v132, -1.0
    %v182 = vmax.f32 %v133, -1.0
    %v183 = vmin.f32 %v134, 1.0
    %v184 = vmin.f32 %v135, 1.0
    %v185 = vmin.f32 %v136, 1.0
    %v186 = vmin.f32 %v137, 1.0
    %v187 = vmin.f32 %v138, 1.0
    %v188 = vmin.f32 %v139, 1.0
    %v189 = vmin.f32 %v140, 1.0
    %v190 = vmin.f32 %v141, 1.0
    %v191 = vmin.f32 %v142, 1.0
    %v192 = vmin.f32 %v143, 1.0
    %v193 = vmin.f32 %v144, 1.0
    %v194 = vmin.f32 %v145, 1.0
    %v195 = vmin.f32 %v146, 1.0
    %v196 = vmin.f32 %v147, 1.0
    %v197 = vmin.f32 %v148, 1.0
    %v198 = vmin.f32 %v149, 1.0
    %v199 = vmin.f32 %v150, 1.0
    %v200 = vmin.f32 %v151, 1.0
    %v201 = vmin.f32 %v152, 1.0
    %v202 = vmin.f32 %v153, 1.0
    %v203 = vmin.f32 %v154, 1.0
    %v204 = vmin.f32 %v155, 1.0
    %v205 = vmin.f32 %v156, 1.0
    %v206 = vmin.f32 %v157, 1.0
    %v207 = vmin.f32 %v158, 1.0
    %v208 = vmin.f32 %v159, 1.0
    %v209 = vmin.f32 %v160, 1.0
    %v210 = vmin.f32 %v161, 1.0
    %v211 = vmin.f32 %v162, 1.0
    %v212 = vmin.f32 %v163, 1.0
    %v213 = vmin.f32 %v164, 1.0
    %v214 = vmin.f32 %v165, 1.0
    %v215 = vmin.f32 %v166, 1.0
    %v216 = vmin.f32 %v167, 1.0
    %v217 = vmin.f32 %v168, 1.0
    %v218 = vmin.f32 %v169, 1.0
    %v219 = vmin.f32 %v170, 1.0
    %v220 = vmin.f32 %v171, 1.0
    %v221 = vmin.f32 %v172, 1.0
    %v222 = vmin.f32 %v173, 1.0
    %v223 = vmin.f32 %v174, 1.0
    %v224 = vmin.f32 %v175, 1.0
    %v225 = vmin.f32 %v176, 1.0
    %v226 = vmin.f32 %v177, 1.0
    %v227 = vmin.f32 %v178, 1.0
    %v228 = vmin.f32 %v179, 1.0
    %v229 = vmin.f32 %v180, 1.0
    %v230 = vmin.f32 %v181, 1.0
    %v231 = vmin.f32 %v182, 1.0
    %v232 = vmul.f32 %v183, 127.0
    %v233 = vmul.f32 %v184, 127.0
    %v234 = vmul.f32 %v185, 127.0
    %v235 = vmul.f32 %v186, 127.0
    %v236 = vmul.f32 %v187, 127.0
    %v237 = vmul.f32 %v188, 127.0
    %v238 = vmul.f32 %v189, 127.0
    %v239 = vmul.f32 %v190, 127.0
    %v240 = vmul.f32 %v191, 127.0
    %v241 = vmul.f32 %v192, 127.0
    %v242 = vmul.f32 %v193, 127.0
    %v243 = vmul.f32 %v194, 127.0
    %v244 = vmul.f32 %v195, 127.0
    %v245 = vmul.f32 %v196, 127.0
    %v246 = vmul.f32 %v197, 127.0
    %v247 = vmul.f32 %v198, 127.0
    %v248 = vmul.f32 %v199, 127.0
    %v249 = vmul.f32 %v200, 127.0
    %v250 = vmul.f32 %v201, 127.0
    %v251 = vmul.f32 %v202, 127.0
    %v252 = vmul.f32 %v203, 127.0
    %v253 = vmul.f32 %v204, 127.0
    %v254 = vmul.f32 %v205, 127.0
    %v255 = vmul.f32 %v206, 127.0
    %v256 = vmul.f32 %v207, 127.0
    %v257 = vmul.f32 %v208, 127.0
    %v258 = vmul.f32 %v209, 127.0
    %v259 = vmul.f32 %v210, 127.0
    %v260 = vmul.f32 %v211, 127.0
    %v261 = vmul.f32 %v212, 127.0
    %v262 = vmul.f32 %v213, 127.0
    %v263 = vmul.f32 %v214, 127.0
    %v264 = vmul.f32 %v215, 127.0
    %v265 = vmul.f32 %v216, 127.0
    %v266 = vmul.f32 %v217, 127.0
    %v267 = vmul.f32 %v218, 127.0
    %v268 = vmul.f32 %v219, 127.0
    %v269 = vmul.f32 %v220, 127.0
    %v270 = vmul.f32 %v221, 127.0
    %v271 = vmul.f32 %v222, 127.0
    %v272 = vmul.f32 %v223, 127.0
    %v273 = vmul.f32 %v224, 127.0
    %v274 = vmul.f32 %v225, 127.0
    %v275 = vmul.f32 %v226, 127.0
    %v276 = vmul.f32 %v227, 127.0
    %v277 = vmul.f32 %v228, 127.0
    %v278 = vmul.f32 %v229, 127.0
    %v279 = vmul.f32 %v230, 127.0
    %v280 = vmul.f32 %v231, 127.0
    %v281 = vround.ne.pseudo %v232
    %v282 = vround.ne.pseudo %v233
    %v283 = vround.ne.pseudo %v234
    %v284 = vround.ne.pseudo %v235
    %v285 = vround.ne.pseudo %v236
    %v286 = vround.ne.pseudo %v237
    %v287 = vround.ne.pseudo %v238
    %v288 = vround.ne.pseudo %v239
    %v289 = vround.ne.pseudo %v240
    %v290 = vround.ne.pseudo %v241
    %v291 = vround.ne.pseudo %v242
    %v292 = vround.ne.pseudo %v243
    %v293 = vround.ne.pseudo %v244
    %v294 = vround.ne.pseudo %v245
    %v295 = vround.ne.pseudo %v246
    %v296 = vround.ne.pseudo %v247
    %v297 = vround.ne.pseudo %v248
    %v298 = vround.ne.pseudo %v249
    %v299 = vround.ne.pseudo %v250
    %v300 = vround.ne.pseudo %v251
    %v301 = vround.ne.pseudo %v252
    %v302 = vround.ne.pseudo %v253
    %v303 = vround.ne.pseudo %v254
    %v304 = vround.ne.pseudo %v255
    %v305 = vround.ne.pseudo %v256
    %v306 = vround.ne.pseudo %v257
    %v307 = vround.ne.pseudo %v258
    %v308 = vround.ne.pseudo %v259
    %v309 = vround.ne.pseudo %v260
    %v310 = vround.ne.pseudo %v261
    %v311 = vround.ne.pseudo %v262
    %v312 = vround.ne.pseudo %v263
    %v313 = vround.ne.pseudo %v264
    %v314 = vround.ne.pseudo %v265
    %v315 = vround.ne.pseudo %v266
    %v316 = vround.ne.pseudo %v267
    %v317 = vround.ne.pseudo %v268
    %v318 = vround.ne.pseudo %v269
    %v319 = vround.ne.pseudo %v270
    %v320 = vround.ne.pseudo %v271
    %v321 = vround.ne.pseudo %v272
    %v322 = vround.ne.pseudo %v273
    %v323 = vround.ne.pseudo %v274
    %v324 = vround.ne.pseudo %v275
    %v325 = vround.ne.pseudo %v276
    %v326 = vround.ne.pseudo %v277
    %v327 = vround.ne.pseudo %v278
    %v328 = vround.ne.pseudo %v279
    %v329 = vround.ne.pseudo %v280
    %v330 = vstv %s34
    %v331 = vmul.f32 %v281, %v330
    %v332 = vmul.f32 %v282, %v330
    %v333 = vmul.f32 %v283, %v330
    %v334 = vmul.f32 %v284, %v330
    %v335 = vmul.f32 %v285, %v330
    %v336 = vmul.f32 %v286, %v330
    %v337 = vmul.f32 %v287, %v330
    %v338 = vmul.f32 %v288, %v330
    %v339 = vmul.f32 %v289, %v330
    %v340 = vmul.f32 %v290, %v330
    %v341 = vmul.f32 %v291, %v330
    %v342 = vmul.f32 %v292, %v330
    %v343 = vmul.f32 %v293, %v330
    %v344 = vmul.f32 %v294, %v330
    %v345 = vmul.f32 %v295, %v330
    %v346 = vmul.f32 %v296, %v330
    %v347 = vmul.f32 %v297, %v330
    %v348 = vmul.f32 %v298, %v330
    %v349 = vmul.f32 %v299, %v330
    %v350 = vmul.f32 %v300, %v330
    %v351 = vmul.f32 %v301, %v330
    %v352 = vmul.f32 %v302, %v330
    %v353 = vmul.f32 %v303, %v330
    %v354 = vmul.f32 %v304, %v330
    %v355 = vmul.f32 %v305, %v330
    %v356 = vmul.f32 %v306, %v330
    %v357 = vmul.f32 %v307, %v330
    %v358 = vmul.f32 %v308, %v330
    %v359 = vmul.f32 %v309, %v330
    %v360 = vmul.f32 %v310, %v330
    %v361 = vmul.f32 %v311, %v330
    %v362 = vmul.f32 %v312, %v330
    %v363 = vmul.f32 %v313, %v330
    %v364 = vmul.f32 %v314, %v330
    %v365 = vmul.f32 %v315, %v330
    %v366 = vmul.f32 %v316, %v330
    %v367 = vmul.f32 %v317, %v330
    %v368 = vmul.f32 %v318, %v330
    %v369 = vmul.f32 %v319, %v330
    %v370 = vmul.f32 %v320, %v330
    %v371 = vmul.f32 %v321, %v330
    %v372 = vmul.f32 %v322, %v330
    %v373 = vmul.f32 %v323, %v330
    %v374 = vmul.f32 %v324, %v330
    %v375 = vmul.f32 %v325, %v330
    %v376 = vmul.f32 %v326, %v330
    %v377 = vmul.f32 %v327, %v330
    %v378 = vmul.f32 %v328, %v330
    %v379 = vmul.f32 %v329, %v330
    %v380 = vld [vmem:[%s1] sm:$0xff]
    %v381 = vld [vmem:[%s1 + $0x8] sm:$0xff]
    %v382 = vld [vmem:[%s1 + $0x10] sm:$0xff]
    %v383 = vld [vmem:[%s1 + $0x18] sm:$0xff]
    %v384 = vld [vmem:[%s1 + $0x20] sm:$0xf]
    %v385 = vld [vmem:[%s2] sm:$0x1]
    %v387 = vperm.slane %v385, 0
    %vm389 = vcmask 293888
    %v391 = vsel %vm389, %v331, 0
    %v394 = vsel %vm389, %v332, 0
    %v397 = vsel %vm389, %v333, 0
    %v400 = vsel %vm389, %v334, 0
    %v403 = vsel %vm389, %v335, 0
    %v406 = vsel %vm389, %v336, 0
    %v409 = vsel %vm389, %v337, 0
    %v412 = vsel %vm389, %v338, 0
    %v415 = vsel %vm389, %v339, 0
    %v418 = vsel %vm389, %v340, 0
    %v421 = vsel %vm389, %v341, 0
    %v424 = vsel %vm389, %v342, 0
    %v427 = vsel %vm389, %v343, 0
    %v430 = vsel %vm389, %v344, 0
    %v433 = vsel %vm389, %v345, 0
    %v436 = vsel %vm389, %v346, 0
    %v439 = vsel %vm389, %v347, 0
    %v442 = vsel %vm389, %v348, 0
    %v445 = vsel %vm389, %v349, 0
    %v448 = vsel %vm389, %v350, 0
    %v451 = vsel %vm389, %v351, 0
    %v454 = vsel %vm389, %v352, 0
    %v457 = vsel %vm389, %v353, 0
    %v460 = vsel %vm389, %v354, 0
    %v463 = vsel %vm389, %v355, 0
    %v466 = vsel %vm389, %v356, 0
    %v469 = vsel %vm389, %v357, 0
    %v472 = vsel %vm389, %v358, 0
    %v475 = vsel %vm389, %v359, 0
    %v478 = vsel %vm389, %v360, 0
    %v481 = vsel %vm389, %v361, 0
    %v484 = vsel %vm389, %v362, 0
    %v487 = vsel %vm389, %v363, 0
    %v490 = vsel %vm389, %v364, 0
    %v493 = vsel %vm389, %v365, 0
    %v496 = vsel %vm389, %v366, 0
    %v499 = vsel %vm389, %v367, 0
    %v502 = vsel %vm389, %v368, 0
    %v505 = vsel %vm389, %v369, 0
    %v508 = vsel %vm389, %v370, 0
    %v511 = vsel %vm389, %v371, 0
    %v514 = vsel %vm389, %v372, 0
    %v517 = vsel %vm389, %v373, 0
    %v520 = vsel %vm389, %v374, 0
    %v523 = vsel %vm389, %v375, 0
    %v526 = vsel %vm389, %v376, 0
    %v529 = vsel %vm389, %v377, 0
    %v532 = vsel %vm389, %v378, 0
    %v535 = vsel %vm389, %v379, 0
    %vm537 = vcmask 1043456
    %v539 = vsel %vm537, %v384, 0
    %541 = vmatpush.msra.mxu0 0.0
    %542 = vmatpush.msra.mxu0 0.0
    %543 = vmatpush.msra.mxu0 0.0
    %544 = vmatpush.msra.mxu0 0.0
    %545 = vmatpush.msra.mxu0 0.0
    %546 = vmatpush.msra.mxu0 0.0
    %547 = vmatpush.msra.mxu0 0.0
    %548 = vmatpush.msra.mxu0 0.0
    %549 = vmatpush.msra.mxu0 0.0
    %550 = vmatpush.msra.mxu0 0.0
    %551 = vmatpush.msra.mxu0 0.0
    %552 = vmatpush.msra.mxu0 %v539
    %553 = vmatpush.msra.mxu0 %v383
    %554 = vmatpush.msra.mxu0 %v382
    %555 = vmatpush.msra.mxu0 %v381
    %556 = vmatpush.msra.mxu0 %v380
    %557 = vmatmul.f32.gmra.mxu0 %v391
    %v558 = vpop.f32.mrf.mxu0
    %v559 = vadd.f32 %v387, %v558
    %560 = vmatmul.f32.gmra.mxu0 %v394
    %v561 = vpop.f32.mrf.mxu0
    %v562 = vadd.f32 %v387, %v561
    %563 = vmatmul.f32.gmra.mxu0 %v397
    %v564 = vpop.f32.mrf.mxu0
    %v565 = vadd.f32 %v387, %v564
    %566 = vmatmul.f32.gmra.mxu0 %v400
    %v567 = vpop.f32.mrf.mxu0
    %v568 = vadd.f32 %v387, %v567
    %569 = vmatmul.f32.gmra.mxu0 %v403
    %v570 = vpop.f32.mrf.mxu0
    %v571 = vadd.f32 %v387, %v570
    %572 = vmatmul.f32.gmra.mxu0 %v406
    %v573 = vpop.f32.mrf.mxu0
    %v574 = vadd.f32 %v387, %v573
    %575 = vmatmul.f32.gmra.mxu0 %v409
    %v576 = vpop.f32.mrf.mxu0
    %v577 = vadd.f32 %v387, %v576
    %578 = vmatmul.f32.gmra.mxu0 %v412
    %v579 = vpop.f32.mrf.mxu0
    %v580 = vadd.f32 %v387, %v579
    %581 = vmatmul.f32.gmra.mxu0 %v415
    %v582 = vpop.f32.mrf.mxu0
    %v583 = vadd.f32 %v387, %v582
    %584 = vmatmul.f32.gmra.mxu0 %v418
    %v585 = vpop.f32.mrf.mxu0
    %v586 = vadd.f32 %v387, %v585
    %587 = vmatmul.f32.gmra.mxu0 %v421
    %v588 = vpop.f32.mrf.mxu0
    %v589 = vadd.f32 %v387, %v588
    %590 = vmatmul.f32.gmra.mxu0 %v424
    %v591 = vpop.f32.mrf.mxu0
    %v592 = vadd.f32 %v387, %v591
    %593 = vmatmul.f32.gmra.mxu0 %v427
    %v594 = vpop.f32.mrf.mxu0
    %v595 = vadd.f32 %v387, %v594
    %596 = vmatmul.f32.gmra.mxu0 %v430
    %v597 = vpop.f32.mrf.mxu0
    %v598 = vadd.f32 %v387, %v597
    %599 = vmatmul.f32.gmra.mxu0 %v433
    %v600 = vpop.f32.mrf.mxu0
    %v601 = vadd.f32 %v387, %v600
    %602 = vmatmul.f32.gmra.mxu0 %v436
    %v603 = vpop.f32.mrf.mxu0
    %v604 = vadd.f32 %v387, %v603
    %605 = vmatmul.f32.gmra.mxu0 %v439
    %v606 = vpop.f32.mrf.mxu0
    %v607 = vadd.f32 %v387, %v606
    %608 = vmatmul.f32.gmra.mxu0 %v442
    %v609 = vpop.f32.mrf.mxu0
    %v610 = vadd.f32 %v387, %v609
    %611 = vmatmul.f32.gmra.mxu0 %v445
    %v612 = vpop.f32.mrf.mxu0
    %v613 = vadd.f32 %v387, %v612
    %614 = vmatmul.f32.gmra.mxu0 %v448
    %v615 = vpop.f32.mrf.mxu0
    %v616 = vadd.f32 %v387, %v615
    %617 = vmatmul.f32.gmra.mxu0 %v451
    %v618 = vpop.f32.mrf.mxu0
    %v619 = vadd.f32 %v387, %v618
    %620 = vmatmul.f32.gmra.mxu0 %v454
    %v621 = vpop.f32.mrf.mxu0
    %v622 = vadd.f32 %v387, %v621
    %623 = vmatmul.f32.gmra.mxu0 %v457
    %v624 = vpop.f32.mrf.mxu0
    %v625 = vadd.f32 %v387, %v624
    %626 = vmatmul.f32.gmra.mxu0 %v460
    %v627 = vpop.f32.mrf.mxu0
    %v628 = vadd.f32 %v387, %v627
    %629 = vmatmul.f32.gmra.mxu0 %v463
    %v630 = vpop.f32.mrf.mxu0
    %v631 = vadd.f32 %v387, %v630
    %632 = vmatmul.f32.gmra.mxu0 %v466
    %v633 = vpop.f32.mrf.mxu0
    %v634 = vadd.f32 %v387, %v633
    %635 = vmatmul.f32.gmra.mxu0 %v469
    %v636 = vpop.f32.mrf.mxu0
    %v637 = vadd.f32 %v387, %v636
    %638 = vmatmul.f32.gmra.mxu0 %v472
    %v639 = vpop.f32.mrf.mxu0
    %v640 = vadd.f32 %v387, %v639
    %641 = vmatmul.f32.gmra.mxu0 %v475
    %v642 = vpop.f32.mrf.mxu0
    %v643 = vadd.f32 %v387, %v642
    %644 = vmatmul.f32.gmra.mxu0 %v478
    %v645 = vpop.f32.mrf.mxu0
    %v646 = vadd.f32 %v387, %v645
    %647 = vmatmul.f32.gmra.mxu0 %v481
    %v648 = vpop.f32.mrf.mxu0
    %v649 = vadd.f32 %v387, %v648
    %650 = vmatmul.f32.gmra.mxu0 %v484
    %v651 = vpop.f32.mrf.mxu0
    %v652 = vadd.f32 %v387, %v651
    %653 = vmatmul.f32.gmra.mxu0 %v487
    %v654 = vpop.f32.mrf.mxu0
    %v655 = vadd.f32 %v387, %v654
    %656 = vmatmul.f32.gmra.mxu0 %v490
    %v657 = vpop.f32.mrf.mxu0
    %v658 = vadd.f32 %v387, %v657
    %659 = vmatmul.f32.gmra.mxu0 %v493
    %v660 = vpop.f32.mrf.mxu0
    %v661 = vadd.f32 %v387, %v660
    %662 = vmatmul.f32.gmra.mxu0 %v496
    %v663 = vpop.f32.mrf.mxu0
    %v664 = vadd.f32 %v387, %v663
    %665 = vmatmul.f32.gmra.mxu0 %v499
    %v666 = vpop.f32.mrf.mxu0
    %v667 = vadd.f32 %v387, %v666
    %668 = vmatmul.f32.gmra.mxu0 %v502
    %v669 = vpop.f32.mrf.mxu0
    %v670 = vadd.f32 %v387, %v669
    %671 = vmatmul.f32.gmra.mxu0 %v505
    %v672 = vpop.f32.mrf.mxu0
    %v673 = vadd.f32 %v387, %v672
    %674 = vmatmul.f32.gmra.mxu0 %v508
    %v675 = vpop.f32.mrf.mxu0
    %v676 = vadd.f32 %v387, %v675
    %677 = vmatmul.f32.gmra.mxu0 %v511
    %v678 = vpop.f32.mrf.mxu0
    %v679 = vadd.f32 %v387, %v678
    %680 = vmatmul.f32.gmra.mxu0 %v514
    %v681 = vpop.f32.mrf.mxu0
    %v682 = vadd.f32 %v387, %v681
    %683 = vmatmul.f32.gmra.mxu0 %v517
    %v684 = vpop.f32.mrf.mxu0
    %v685 = vadd.f32 %v387, %v684
    %686 = vmatmul.f32.gmra.mxu0 %v520
    %v687 = vpop.f32.mrf.mxu0
    %v688 = vadd.f32 %v387, %v687
    %689 = vmatmul.f32.gmra.mxu0 %v523
    %v690 = vpop.f32.mrf.mxu0
    %v691 = vadd.f32 %v387, %v690
    %692 = vmatmul.f32.gmra.mxu0 %v526
    %v693 = vpop.f32.mrf.mxu0
    %v694 = vadd.f32 %v387, %v693
    %695 = vmatmul.f32.gmra.mxu0 %v529
    %v696 = vpop.f32.mrf.mxu0
    %v697 = vadd.f32 %v387, %v696
    %698 = vmatmul.f32.gmra.mxu0 %v532
    %v699 = vpop.f32.mrf.mxu0
    %v700 = vadd.f32 %v387, %v699
    %701 = vmatmul.f32.gmra.mxu0 %v535
    %v702 = vpop.f32.mrf.mxu0
    %v703 = vadd.f32 %v387, %v702
    %704 = vdwg.mxu0
    %v705 = vmul.f32 %v331, %v331
    %v706 = vmul.f32 %v332, %v332
    %v707 = vmul.f32 %v333, %v333
    %v708 = vmul.f32 %v334, %v334
    %v709 = vmul.f32 %v335, %v335
    %v710 = vmul.f32 %v336, %v336
    %v711 = vmul.f32 %v337, %v337
    %v712 = vmul.f32 %v338, %v338
    %v713 = vmul.f32 %v339, %v339
    %v714 = vmul.f32 %v340, %v340
    %v715 = vmul.f32 %v341, %v341
    %v716 = vmul.f32 %v342, %v342
    %v717 = vmul.f32 %v343, %v343
    %v718 = vmul.f32 %v344, %v344
    %v719 = vmul.f32 %v345, %v345
    %v720 = vmul.f32 %v346, %v346
    %v721 = vmul.f32 %v347, %v347
    %v722 = vmul.f32 %v348, %v348
    %v723 = vmul.f32 %v349, %v349
    %v724 = vmul.f32 %v350, %v350
    %v725 = vmul.f32 %v351, %v351
    %v726 = vmul.f32 %v352, %v352
    %v727 = vmul.f32 %v353, %v353
    %v728 = vmul.f32 %v354, %v354
    %v729 = vmul.f32 %v355, %v355
    %v730 = vmul.f32 %v356, %v356
    %v731 = vmul.f32 %v357, %v357
    %v732 = vmul.f32 %v358, %v358
    %v733 = vmul.f32 %v359, %v359
    %v734 = vmul.f32 %v360, %v360
    %v735 = vmul.f32 %v361, %v361
    %v736 = vmul.f32 %v362, %v362
    %v737 = vmul.f32 %v363, %v363
    %v738 = vmul.f32 %v364, %v364
    %v739 = vmul.f32 %v365, %v365
    %v740 = vmul.f32 %v366, %v366
    %v741 = vmul.f32 %v367, %v367
    %v742 = vmul.f32 %v368, %v368
    %v743 = vmul.f32 %v369, %v369
    %v744 = vmul.f32 %v370, %v370
    %v745 = vmul.f32 %v371, %v371
    %v746 = vmul.f32 %v372, %v372
    %v747 = vmul.f32 %v373, %v373
    %v748 = vmul.f32 %v374, %v374
    %v749 = vmul.f32 %v375, %v375
    %v750 = vmul.f32 %v376, %v376
    %v751 = vmul.f32 %v377, %v377
    %v752 = vmul.f32 %v378, %v378
    %v753 = vmul.f32 %v379, %v379
    %v754 = vld [vmem:[%s3] sm:$0x1]
    %v756 = vperm.slane %v754, 0
    %v758 = vmul.f32 %v705, %v756
    %v759 = vmul.f32 %v706, %v756
    %v760 = vmul.f32 %v707, %v756
    %v761 = vmul.f32 %v708, %v756
    %v762 = vmul.f32 %v709, %v756
    %v763 = vmul.f32 %v710, %v756
    %v764 = vmul.f32 %v711, %v756
    %v765 = vmul.f32 %v712, %v756
    %v766 = vmul.f32 %v713, %v756
    %v767 = vmul.f32 %v714, %v756
    %v768 = vmul.f32 %v715, %v756
    %v769 = vmul.f32 %v716, %v756
    %v770 = vmul.f32 %v717, %v756
    %v771 = vmul.f32 %v718, %v756
    %v772 = vmul.f32 %v719, %v756
    %v773 = vmul.f32 %v720, %v756
    %v774 = vmul.f32 %v721, %v756
    %v775 = vmul.f32 %v722, %v756
    %v776 = vmul.f32 %v723, %v756
    %v777 = vmul.f32 %v724, %v756
    %v778 = vmul.f32 %v725, %v756
    %v779 = vmul.f32 %v726, %v756
    %v780 = vmul.f32 %v727, %v756
    %v781 = vmul.f32 %v728, %v756
    %v782 = vmul.f32 %v729, %v756
    %v783 = vmul.f32 %v730, %v756
    %v784 = vmul.f32 %v731, %v756
    %v785 = vmul.f32 %v732, %v756
    %v786 = vmul.f32 %v733, %v756
    %v787 = vmul.f32 %v734, %v756
    %v788 = vmul.f32 %v735, %v756
    %v789 = vmul.f32 %v736, %v756
    %v790 = vmul.f32 %v737, %v756
    %v791 = vmul.f32 %v738, %v756
    %v792 = vmul.f32 %v739, %v756
    %v793 = vmul.f32 %v740, %v756
    %v794 = vmul.f32 %v741, %v756
    %v795 = vmul.f32 %v742, %v756
    %v796 = vmul.f32 %v743, %v756
    %v797 = vmul.f32 %v744, %v756
    %v798 = vmul.f32 %v745, %v756
    %v799 = vmul.f32 %v746, %v756
    %v800 = vmul.f32 %v747, %v756
    %v801 = vmul.f32 %v748, %v756
    %v802 = vmul.f32 %v749, %v756
    %v803 = vmul.f32 %v750, %v756
    %v804 = vmul.f32 %v751, %v756
    %v805 = vmul.f32 %v752, %v756
    %v806 = vmul.f32 %v753, %v756
    %v807 = vsel %vm389, %v758, 0.0
    %808 = vadd.xlane.f32.xlu0 %v807
    %v809 = vpop.xlane.xlu0 %808
    %v810 = vsel %vm389, %v759, 0.0
    %811 = vadd.xlane.f32.xlu0 %v810
    %v812 = vpop.xlane.xlu0 %811
    %v813 = vsel %vm389, %v760, 0.0
    %814 = vadd.xlane.f32.xlu0 %v813
    %v815 = vpop.xlane.xlu0 %814
    %v816 = vsel %vm389, %v761, 0.0
    %817 = vadd.xlane.f32.xlu0 %v816
    %v818 = vpop.xlane.xlu0 %817
    %v819 = vsel %vm389, %v762, 0.0
    %820 = vadd.xlane.f32.xlu0 %v819
    %v821 = vpop.xlane.xlu0 %820
    %v822 = vsel %vm389, %v763, 0.0
    %823 = vadd.xlane.f32.xlu0 %v822
    %v824 = vpop.xlane.xlu0 %823
    %v825 = vsel %vm389, %v764, 0.0
    %826 = vadd.xlane.f32.xlu0 %v825
    %v827 = vpop.xlane.xlu0 %826
    %v828 = vsel %vm389, %v765, 0.0
    %829 = vadd.xlane.f32.xlu0 %v828
    %v830 = vpop.xlane.xlu0 %829
    %v831 = vsel %vm389, %v766, 0.0
    %832 = vadd.xlane.f32.xlu0 %v831
    %v833 = vpop.xlane.xlu0 %832
    %v834 = vsel %vm389, %v767, 0.0
    %835 = vadd.xlane.f32.xlu0 %v834
    %v836 = vpop.xlane.xlu0 %835
    %v837 = vsel %vm389, %v768, 0.0
    %838 = vadd.xlane.f32.xlu0 %v837
    %v839 = vpop.xlane.xlu0 %838
    %v840 = vsel %vm389, %v769, 0.0
    %841 = vadd.xlane.f32.xlu0 %v840
    %v842 = vpop.xlane.xlu0 %841
    %v843 = vsel %vm389, %v770, 0.0
    %844 = vadd.xlane.f32.xlu0 %v843
    %v845 = vpop.xlane.xlu0 %844
    %v846 = vsel %vm389, %v771, 0.0
    %847 = vadd.xlane.f32.xlu0 %v846
    %v848 = vpop.xlane.xlu0 %847
    %v849 = vsel %vm389, %v772, 0.0
    %850 = vadd.xlane.f32.xlu0 %v849
    %v851 = vpop.xlane.xlu0 %850
    %v852 = vsel %vm389, %v773, 0.0
    %853 = vadd.xlane.f32.xlu0 %v852
    %v854 = vpop.xlane.xlu0 %853
    %v855 = vsel %vm389, %v774, 0.0
    %856 = vadd.xlane.f32.xlu0 %v855
    %v857 = vpop.xlane.xlu0 %856
    %v858 = vsel %vm389, %v775, 0.0
    %859 = vadd.xlane.f32.xlu0 %v858
    %v860 = vpop.xlane.xlu0 %859
    %v861 = vsel %vm389, %v776, 0.0
    %862 = vadd.xlane.f32.xlu0 %v861
    %v863 = vpop.xlane.xlu0 %862
    %v864 = vsel %vm389, %v777, 0.0
    %865 = vadd.xlane.f32.xlu0 %v864
    %v866 = vpop.xlane.xlu0 %865
    %v867 = vsel %vm389, %v778, 0.0
    %868 = vadd.xlane.f32.xlu0 %v867
    %v869 = vpop.xlane.xlu0 %868
    %v870 = vsel %vm389, %v779, 0.0
    %871 = vadd.xlane.f32.xlu0 %v870
    %v872 = vpop.xlane.xlu0 %871
    %v873 = vsel %vm389, %v780, 0.0
    %874 = vadd.xlane.f32.xlu0 %v873
    %v875 = vpop.xlane.xlu0 %874
    %v876 = vsel %vm389, %v781, 0.0
    %877 = vadd.xlane.f32.xlu0 %v876
    %v878 = vpop.xlane.xlu0 %877
    %v879 = vsel %vm389, %v782, 0.0
    %880 = vadd.xlane.f32.xlu0 %v879
    %v881 = vpop.xlane.xlu0 %880
    %v882 = vsel %vm389, %v783, 0.0
    %883 = vadd.xlane.f32.xlu0 %v882
    %v884 = vpop.xlane.xlu0 %883
    %v885 = vsel %vm389, %v784, 0.0
    %886 = vadd.xlane.f32.xlu0 %v885
    %v887 = vpop.xlane.xlu0 %886
    %v888 = vsel %vm389, %v785, 0.0
    %889 = vadd.xlane.f32.xlu0 %v888
    %v890 = vpop.xlane.xlu0 %889
    %v891 = vsel %vm389, %v786, 0.0
    %892 = vadd.xlane.f32.xlu0 %v891
    %v893 = vpop.xlane.xlu0 %892
    %v894 = vsel %vm389, %v787, 0.0
    %895 = vadd.xlane.f32.xlu0 %v894
    %v896 = vpop.xlane.xlu0 %895
    %v897 = vsel %vm389, %v788, 0.0
    %898 = vadd.xlane.f32.xlu0 %v897
    %v899 = vpop.xlane.xlu0 %898
    %v900 = vsel %vm389, %v789, 0.0
    %901 = vadd.xlane.f32.xlu0 %v900
    %v902 = vpop.xlane.xlu0 %901
    %v903 = vsel %vm389, %v790, 0.0
    %904 = vadd.xlane.f32.xlu0 %v903
    %v905 = vpop.xlane.xlu0 %904
    %v906 = vsel %vm389, %v791, 0.0
    %907 = vadd.xlane.f32.xlu0 %v906
    %v908 = vpop.xlane.xlu0 %907
    %v909 = vsel %vm389, %v792, 0.0
    %910 = vadd.xlane.f32.xlu0 %v909
    %v911 = vpop.xlane.xlu0 %910
    %v912 = vsel %vm389, %v793, 0.0
    %913 = vadd.xlane.f32.xlu0 %v912
    %v914 = vpop.xlane.xlu0 %913
    %v915 = vsel %vm389, %v794, 0.0
    %916 = vadd.xlane.f32.xlu0 %v915
    %v917 = vpop.xlane.xlu0 %916
    %v918 = vsel %vm389, %v795, 0.0
    %919 = vadd.xlane.f32.xlu0 %v918
    %v920 = vpop.xlane.xlu0 %919
    %v921 = vsel %vm389, %v796, 0.0
    %922 = vadd.xlane.f32.xlu0 %v921
    %v923 = vpop.xlane.xlu0 %922
    %v924 = vsel %vm389, %v797, 0.0
    %925 = vadd.xlane.f32.xlu0 %v924
    %v926 = vpop.xlane.xlu0 %925
    %v927 = vsel %vm389, %v798, 0.0
    %928 = vadd.xlane.f32.xlu0 %v927
    %v929 = vpop.xlane.xlu0 %928
    %v930 = vsel %vm389, %v799, 0.0
    %931 = vadd.xlane.f32.xlu0 %v930
    %v932 = vpop.xlane.xlu0 %931
    %v933 = vsel %vm389, %v800, 0.0
    %934 = vadd.xlane.f32.xlu0 %v933
    %v935 = vpop.xlane.xlu0 %934
    %v936 = vsel %vm389, %v801, 0.0
    %937 = vadd.xlane.f32.xlu0 %v936
    %v938 = vpop.xlane.xlu0 %937
    %v939 = vsel %vm389, %v802, 0.0
    %940 = vadd.xlane.f32.xlu0 %v939
    %v941 = vpop.xlane.xlu0 %940
    %v942 = vsel %vm389, %v803, 0.0
    %943 = vadd.xlane.f32.xlu0 %v942
    %v944 = vpop.xlane.xlu0 %943
    %v945 = vsel %vm389, %v804, 0.0
    %946 = vadd.xlane.f32.xlu0 %v945
    %v947 = vpop.xlane.xlu0 %946
    %v948 = vsel %vm389, %v805, 0.0
    %949 = vadd.xlane.f32.xlu0 %v948
    %v950 = vpop.xlane.xlu0 %949
    %v951 = vsel %vm389, %v806, 0.0
    %952 = vadd.xlane.f32.xlu0 %v951
    %v953 = vpop.xlane.xlu0 %952
    %v954 = vlaneseq
    %v955 = vand.u32 %v954, 127
    %vm956 = vcmp.eq.s32.totalorder %v955, 8
    %v957 = vsel %vm956, %v809, %v559
    %v958 = vsel %vm956, %v812, %v562
    %v959 = vsel %vm956, %v815, %v565
    %v960 = vsel %vm956, %v818, %v568
    %v961 = vsel %vm956, %v821, %v571
    %v962 = vsel %vm956, %v824, %v574
    %v963 = vsel %vm956, %v827, %v577
    %v964 = vsel %vm956, %v830, %v580
    %v965 = vsel %vm956, %v833, %v583
    %v966 = vsel %vm956, %v836, %v586
    %v967 = vsel %vm956, %v839, %v589
    %v968 = vsel %vm956, %v842, %v592
    %v969 = vsel %vm956, %v845, %v595
    %v970 = vsel %vm956, %v848, %v598
    %v971 = vsel %vm956, %v851, %v601
    %v972 = vsel %vm956, %v854, %v604
    %v973 = vsel %vm956, %v857, %v607
    %v974 = vsel %vm956, %v860, %v610
    %v975 = vsel %vm956, %v863, %v613
    %v976 = vsel %vm956, %v866, %v616
    %v977 = vsel %vm956, %v869, %v619
    %v978 = vsel %vm956, %v872, %v622
    %v979 = vsel %vm956, %v875, %v625
    %v980 = vsel %vm956, %v878, %v628
    %v981 = vsel %vm956, %v881, %v631
    %v982 = vsel %vm956, %v884, %v634
    %v983 = vsel %vm956, %v887, %v637
    %v984 = vsel %vm956, %v890, %v640
    %v985 = vsel %vm956, %v893, %v643
    %v986 = vsel %vm956, %v896, %v646
    %v987 = vsel %vm956, %v899, %v649
    %v988 = vsel %vm956, %v902, %v652
    %v989 = vsel %vm956, %v905, %v655
    %v990 = vsel %vm956, %v908, %v658
    %v991 = vsel %vm956, %v911, %v661
    %v992 = vsel %vm956, %v914, %v664
    %v993 = vsel %vm956, %v917, %v667
    %v994 = vsel %vm956, %v920, %v670
    %v995 = vsel %vm956, %v923, %v673
    %v996 = vsel %vm956, %v926, %v676
    %v997 = vsel %vm956, %v929, %v679
    %v998 = vsel %vm956, %v932, %v682
    %v999 = vsel %vm956, %v935, %v685
    %v1000 = vsel %vm956, %v938, %v688
    %v1001 = vsel %vm956, %v941, %v691
    %v1002 = vsel %vm956, %v944, %v694
    %v1003 = vsel %vm956, %v947, %v697
    %v1004 = vsel %vm956, %v950, %v700
    %v1005 = vsel %vm956, %v953, %v703
    %1006 = vst [vmem:[%s5] sm:$0xff] %v957
    %1007 = vst [vmem:[%s5 + $0x8] sm:$0xff] %v958
    %1008 = vst [vmem:[%s5 + $0x10] sm:$0xff] %v959
    %1009 = vst [vmem:[%s5 + $0x18] sm:$0xff] %v960
    %1010 = vst [vmem:[%s5 + $0x20] sm:$0xff] %v961
    %1011 = vst [vmem:[%s5 + $0x28] sm:$0xff] %v962
    %1012 = vst [vmem:[%s5 + $0x30] sm:$0xff] %v963
    %1013 = vst [vmem:[%s5 + $0x38] sm:$0xff] %v964
    %1014 = vst [vmem:[%s5 + $0x40] sm:$0xff] %v965
    %1015 = vst [vmem:[%s5 + $0x48] sm:$0xff] %v966
    %1016 = vst [vmem:[%s5 + $0x50] sm:$0xff] %v967
    %1017 = vst [vmem:[%s5 + $0x58] sm:$0xff] %v968
    %1018 = vst [vmem:[%s5 + $0x60] sm:$0xff] %v969
    %1019 = vst [vmem:[%s5 + $0x68] sm:$0xff] %v970
    %1020 = vst [vmem:[%s5 + $0x70] sm:$0xff] %v971
    %1021 = vst [vmem:[%s5 + $0x78] sm:$0xff] %v972
    %1022 = vst [vmem:[%s5 + $0x80] sm:$0xff] %v973
    %1023 = vst [vmem:[%s5 + $0x88] sm:$0xff] %v974
    %1024 = vst [vmem:[%s5 + $0x90] sm:$0xff] %v975
    %1025 = vst [vmem:[%s5 + $0x98] sm:$0xff] %v976
    %1026 = vst [vmem:[%s5 + $0xa0] sm:$0xff] %v977
    %1027 = vst [vmem:[%s5 + $0xa8] sm:$0xff] %v978
    %1028 = vst [vmem:[%s5 + $0xb0] sm:$0xff] %v979
    %1029 = vst [vmem:[%s5 + $0xb8] sm:$0xff] %v980
    %1030 = vst [vmem:[%s5 + $0xc0] sm:$0xff] %v981
    %1031 = vst [vmem:[%s5 + $0xc8] sm:$0xff] %v982
    %1032 = vst [vmem:[%s5 + $0xd0] sm:$0xff] %v983
    %1033 = vst [vmem:[%s5 + $0xd8] sm:$0xff] %v984
    %1034 = vst [vmem:[%s5 + $0xe0] sm:$0xff] %v985
    %1035 = vst [vmem:[%s5 + $0xe8] sm:$0xff] %v986
    %1036 = vst [vmem:[%s5 + $0xf0] sm:$0xff] %v987
    %1037 = vst [vmem:[%s5 + $0xf8] sm:$0xff] %v988
    %1038 = vst [vmem:[%s5 + $0x100] sm:$0xff] %v989
    %1039 = vst [vmem:[%s5 + $0x108] sm:$0xff] %v990
    %1040 = vst [vmem:[%s5 + $0x110] sm:$0xff] %v991
    %1041 = vst [vmem:[%s5 + $0x118] sm:$0xff] %v992
    %1042 = vst [vmem:[%s5 + $0x120] sm:$0xff] %v993
    %1043 = vst [vmem:[%s5 + $0x128] sm:$0xff] %v994
    %1044 = vst [vmem:[%s5 + $0x130] sm:$0xff] %v995
    %1045 = vst [vmem:[%s5 + $0x138] sm:$0xff] %v996
    %1046 = vst [vmem:[%s5 + $0x140] sm:$0xff] %v997
    %1047 = vst [vmem:[%s5 + $0x148] sm:$0xff] %v998
    %1048 = vst [vmem:[%s5 + $0x150] sm:$0xff] %v999
    %1049 = vst [vmem:[%s5 + $0x158] sm:$0xff] %v1000
    %1050 = vst [vmem:[%s5 + $0x160] sm:$0xff] %v1001
    %1051 = vst [vmem:[%s5 + $0x168] sm:$0xff] %v1002
    %1052 = vst [vmem:[%s5 + $0x170] sm:$0xff] %v1003
    %1053 = vst [vmem:[%s5 + $0x178] sm:$0xff] %v1004
    %1054 = vst [vmem:[%s5 + $0x180] sm:$0xff] %v1005
    // Predicated region
    $region26: #{quantize_power_conv2d_forward.4} parent=1 // pred_check
      _
    $region27: #{quantize_power_conv2d_forward.4} parent=1 // pred_check_branch
      %1056 = sbr.rel (0) target = $region29
    $region28: #{quantize_power_conv2d_forward.4} parent=1 // pred_region
      _
    $region29: #{quantize_power_conv2d_forward.4} parent=1 // pred_fallthru
      _
    // Predicated region
    $region30: #{quantize_power_conv2d_forward.4} parent=1 // pred_check
      _
    $region31: #{quantize_power_conv2d_forward.4} parent=1 // pred_check_branch
      %1058 = sbr.rel (0) target = $region33
    $region32: #{quantize_power_conv2d_forward.4} parent=1 // pred_region
      _
    $region33: #{quantize_power_conv2d_forward.4} parent=1 // pred_fallthru
      _
    %1059 = vsyncpa [#allocation3], 1

// kernel: quantize_power_conv2d_forward.5
$region0: #{quantize_power_conv2d_forward.5}
  #allocation0 [shape = 'u32[]', space=smem, size = 0x4, offset = 0x4, fixed_abs, tag = 'smem constant byte address 0x4 - core index']
  #allocation1 [shape = 'u32[72,128]{1,0:T(1,128)}', space=vmem, size = 0x9000, scoped, tag = 'internal scratch']
  %s0 = inlined_call_operand.vmem [shape: f32[392,128], index: 0, kind: input, shape index: {}]
  %s1 = inlined_call_operand.vmem [shape: f32[2], index: 1, kind: input, shape index: {}]
  %s2 = inlined_call_operand.vmem [shape: f32[392,128], index: 2, kind: output, shape index: {}]
  %s3 = sld [smem:[#allocation0]]
  $region22: #{quantize_power_conv2d_forward.5} parent=0
    _
  %s5 = ssub.s32 1, %s3
  %s6 = scalar_select 0, %s5, %s3
  $region1: #{quantize_power_conv2d_forward.5} parent=0
    #allocation2 [shape = 'u8[512]{0}', space=smem, size = 0x200, scoped, tag = 'input window, operand 1, single buffered']
    #allocation3 [shape = 's32[1]{0}', space=sflag, size = 0x4, scoped, tag = 'scoped memory for quantize_power_conv2d_forward.5']
    %7 = vsyncpa [#allocation3], 0
    // Predicated region
    $region2: #{quantize_power_conv2d_forward.5} parent=1 // pred_check
      _
    $region3: #{quantize_power_conv2d_forward.5} parent=1 // pred_check_branch
      %9 = sbr.rel (0) target = $region5
    $region4: #{quantize_power_conv2d_forward.5} parent=1 // pred_region
      _
    $region5: #{quantize_power_conv2d_forward.5} parent=1 // pred_fallthru
      _
    // Predicated region
    $region6: #{quantize_power_conv2d_forward.5} parent=1 // pred_check
      _
    $region7: #{quantize_power_conv2d_forward.5} parent=1 // pred_check_branch
      %11 = sbr.rel (0) target = $region9
    $region8: #{quantize_power_conv2d_forward.5} parent=1 // pred_region
      %13 = vsyncadd [#allocation3], 0
      %s15 = sshll.u32 %s1, 4
      %s16 = int_to_ptr.vmem [resolvable:$true] %s15
      %18 = dma.vmem_to_smem %s16, 16, [#allocation2], [#allocation3]
    $region9: #{quantize_power_conv2d_forward.5} parent=1 // pred_fallthru
      _
    // Predicated region
    $region10: #{quantize_power_conv2d_forward.5} parent=1 // pred_check
      _
    $region11: #{quantize_power_conv2d_forward.5} parent=1 // pred_check_branch
      %20 = sbr.rel (0) target = $region13
    $region12: #{quantize_power_conv2d_forward.5} parent=1 // pred_region
      %22 = dma.done [#allocation3], 16
    $region13: #{quantize_power_conv2d_forward.5} parent=1 // pred_fallthru
      _
    %23 = sfence
    %s24 = sld [smem:[#allocation2]]
    %s25 = sld [smem:[#allocation2 + $0x1]]
    %v26 = vld [vmem:[%s0] sm:$0xff]
    %v27 = vld [vmem:[%s0 + $0x8] sm:$0xff]
    %v28 = vld [vmem:[%s0 + $0x10] sm:$0xff]
    %v29 = vld [vmem:[%s0 + $0x18] sm:$0xff]
    %v30 = vld [vmem:[%s0 + $0x20] sm:$0xff]
    %v31 = vld [vmem:[%s0 + $0x28] sm:$0xff]
    %v32 = vld [vmem:[%s0 + $0x30] sm:$0xff]
    %v33 = vld [vmem:[%s0 + $0x38] sm:$0xff]
    %v34 = vld [vmem:[%s0 + $0x40] sm:$0xff]
    %v35 = vld [vmem:[%s0 + $0x48] sm:$0xff]
    %v36 = vld [vmem:[%s0 + $0x50] sm:$0xff]
    %v37 = vld [vmem:[%s0 + $0x58] sm:$0xff]
    %v38 = vld [vmem:[%s0 + $0x60] sm:$0xff]
    %v39 = vld [vmem:[%s0 + $0x68] sm:$0xff]
    %v40 = vld [vmem:[%s0 + $0x70] sm:$0xff]
    %v41 = vld [vmem:[%s0 + $0x78] sm:$0xff]
    %v42 = vld [vmem:[%s0 + $0x80] sm:$0xff]
    %v43 = vld [vmem:[%s0 + $0x88] sm:$0xff]
    %v44 = vld [vmem:[%s0 + $0x90] sm:$0xff]
    %v45 = vld [vmem:[%s0 + $0x98] sm:$0xff]
    %v46 = vld [vmem:[%s0 + $0xa0] sm:$0xff]
    %v47 = vld [vmem:[%s0 + $0xa8] sm:$0xff]
    %v48 = vld [vmem:[%s0 + $0xb0] sm:$0xff]
    %v49 = vld [vmem:[%s0 + $0xb8] sm:$0xff]
    %v50 = vld [vmem:[%s0 + $0xc0] sm:$0xff]
    %v51 = vld [vmem:[%s0 + $0xc8] sm:$0xff]
    %v52 = vld [vmem:[%s0 + $0xd0] sm:$0xff]
    %v53 = vld [vmem:[%s0 + $0xd8] sm:$0xff]
    %v54 = vld [vmem:[%s0 + $0xe0] sm:$0xff]
    %v55 = vld [vmem:[%s0 + $0xe8] sm:$0xff]
    %v56 = vld [vmem:[%s0 + $0xf0] sm:$0xff]
    %v57 = vld [vmem:[%s0 + $0xf8] sm:$0xff]
    %v58 = vld [vmem:[%s0 + $0x100] sm:$0xff]
    %v59 = vld [vmem:[%s0 + $0x108] sm:$0xff]
    %v60 = vld [vmem:[%s0 + $0x110] sm:$0xff]
    %v61 = vld [vmem:[%s0 + $0x118] sm:$0xff]
    %v62 = vld [vmem:[%s0 + $0x120] sm:$0xff]
    %v63 = vld [vmem:[%s0 + $0x128] sm:$0xff]
    %v64 = vld [vmem:[%s0 + $0x130] sm:$0xff]
    %v65 = vld [vmem:[%s0 + $0x138] sm:$0xff]
    %v66 = vld [vmem:[%s0 + $0x140] sm:$0xff]
    %v67 = vld [vmem:[%s0 + $0x148] sm:$0xff]
    %v68 = vld [vmem:[%s0 + $0x150] sm:$0xff]
    %v69 = vld [vmem:[%s0 + $0x158] sm:$0xff]
    %v70 = vld [vmem:[%s0 + $0x160] sm:$0xff]
    %v71 = vld [vmem:[%s0 + $0x168] sm:$0xff]
    %v72 = vld [vmem:[%s0 + $0x170] sm:$0xff]
    %v73 = vld [vmem:[%s0 + $0x178] sm:$0xff]
    %v74 = vld [vmem:[%s0 + $0x180] sm:$0xff]
    %v75 = vstv %s24
    %v76 = vmul.f32 %v26, %v75
    %v77 = vmul.f32 %v27, %v75
    %v78 = vmul.f32 %v28, %v75
    %v79 = vmul.f32 %v29, %v75
    %v80 = vmul.f32 %v30, %v75
    %v81 = vmul.f32 %v31, %v75
    %v82 = vmul.f32 %v32, %v75
    %v83 = vmul.f32 %v33, %v75
    %v84 = vmul.f32 %v34, %v75
    %v85 = vmul.f32 %v35, %v75
    %v86 = vmul.f32 %v36, %v75
    %v87 = vmul.f32 %v37, %v75
    %v88 = vmul.f32 %v38, %v75
    %v89 = vmul.f32 %v39, %v75
    %v90 = vmul.f32 %v40, %v75
    %v91 = vmul.f32 %v41, %v75
    %v92 = vmul.f32 %v42, %v75
    %v93 = vmul.f32 %v43, %v75
    %v94 = vmul.f32 %v44, %v75
    %v95 = vmul.f32 %v45, %v75
    %v96 = vmul.f32 %v46, %v75
    %v97 = vmul.f32 %v47, %v75
    %v98 = vmul.f32 %v48, %v75
    %v99 = vmul.f32 %v49, %v75
    %v100 = vmul.f32 %v50, %v75
    %v101 = vmul.f32 %v51, %v75
    %v102 = vmul.f32 %v52, %v75
    %v103 = vmul.f32 %v53, %v75
    %v104 = vmul.f32 %v54, %v75
    %v105 = vmul.f32 %v55, %v75
    %v106 = vmul.f32 %v56, %v75
    %v107 = vmul.f32 %v57, %v75
    %v108 = vmul.f32 %v58, %v75
    %v109 = vmul.f32 %v59, %v75
    %v110 = vmul.f32 %v60, %v75
    %v111 = vmul.f32 %v61, %v75
    %v112 = vmul.f32 %v62, %v75
    %v113 = vmul.f32 %v63, %v75
    %v114 = vmul.f32 %v64, %v75
    %v115 = vmul.f32 %v65, %v75
    %v116 = vmul.f32 %v66, %v75
    %v117 = vmul.f32 %v67, %v75
    %v118 = vmul.f32 %v68, %v75
    %v119 = vmul.f32 %v69, %v75
    %v120 = vmul.f32 %v70, %v75
    %v121 = vmul.f32 %v71, %v75
    %v122 = vmul.f32 %v72, %v75
    %v123 = vmul.f32 %v73, %v75
    %v124 = vmul.f32 %v74, %v75
    %v125 = vmax.f32 %v76, -1.0
    %v126 = vmax.f32 %v77, -1.0
    %v127 = vmax.f32 %v78, -1.0
    %v128 = vmax.f32 %v79, -1.0
    %v129 = vmax.f32 %v80, -1.0
    %v130 = vmax.f32 %v81, -1.0
    %v131 = vmax.f32 %v82, -1.0
    %v132 = vmax.f32 %v83, -1.0
    %v133 = vmax.f32 %v84, -1.0
    %v134 = vmax.f32 %v85, -1.0
    %v135 = vmax.f32 %v86, -1.0
    %v136 = vmax.f32 %v87, -1.0
    %v137 = vmax.f32 %v88, -1.0
    %v138 = vmax.f32 %v89, -1.0
    %v139 = vmax.f32 %v90, -1.0
    %v140 = vmax.f32 %v91, -1.0
    %v141 = vmax.f32 %v92, -1.0
    %v142 = vmax.f32 %v93, -1.0
    %v143 = vmax.f32 %v94, -1.0
    %v144 = vmax.f32 %v95, -1.0
    %v145 = vmax.f32 %v96, -1.0
    %v146 = vmax.f32 %v97, -1.0
    %v147 = vmax.f32 %v98, -1.0
    %v148 = vmax.f32 %v99, -1.0
    %v149 = vmax.f32 %v100, -1.0
    %v150 = vmax.f32 %v101, -1.0
    %v151 = vmax.f32 %v102, -1.0
    %v152 = vmax.f32 %v103, -1.0
    %v153 = vmax.f32 %v104, -1.0
    %v154 = vmax.f32 %v105, -1.0
    %v155 = vmax.f32 %v106, -1.0
    %v156 = vmax.f32 %v107, -1.0
    %v157 = vmax.f32 %v108, -1.0
    %v158 = vmax.f32 %v109, -1.0
    %v159 = vmax.f32 %v110, -1.0
    %v160 = vmax.f32 %v111, -1.0
    %v161 = vmax.f32 %v112, -1.0
    %v162 = vmax.f32 %v113, -1.0
    %v163 = vmax.f32 %v114, -1.0
    %v164 = vmax.f32 %v115, -1.0
    %v165 = vmax.f32 %v116, -1.0
    %v166 = vmax.f32 %v117, -1.0
    %v167 = vmax.f32 %v118, -1.0
    %v168 = vmax.f32 %v119, -1.0
    %v169 = vmax.f32 %v120, -1.0
    %v170 = vmax.f32 %v121, -1.0
    %v171 = vmax.f32 %v122, -1.0
    %v172 = vmax.f32 %v123, -1.0
    %v173 = vmax.f32 %v124, -1.0
    %v174 = vmin.f32 %v125, 1.0
    %v175 = vmin.f32 %v126, 1.0
    %v176 = vmin.f32 %v127, 1.0
    %v177 = vmin.f32 %v128, 1.0
    %v178 = vmin.f32 %v129, 1.0
    %v179 = vmin.f32 %v130, 1.0
    %v180 = vmin.f32 %v131, 1.0
    %v181 = vmin.f32 %v132, 1.0
    %v182 = vmin.f32 %v133, 1.0
    %v183 = vmin.f32 %v134, 1.0
    %v184 = vmin.f32 %v135, 1.0
    %v185 = vmin.f32 %v136, 1.0
    %v186 = vmin.f32 %v137, 1.0
    %v187 = vmin.f32 %v138, 1.0
    %v188 = vmin.f32 %v139, 1.0
    %v189 = vmin.f32 %v140, 1.0
    %v190 = vmin.f32 %v141, 1.0
    %v191 = vmin.f32 %v142, 1.0
    %v192 = vmin.f32 %v143, 1.0
    %v193 = vmin.f32 %v144, 1.0
    %v194 = vmin.f32 %v145, 1.0
    %v195 = vmin.f32 %v146, 1.0
    %v196 = vmin.f32 %v147, 1.0
    %v197 = vmin.f32 %v148, 1.0
    %v198 = vmin.f32 %v149, 1.0
    %v199 = vmin.f32 %v150, 1.0
    %v200 = vmin.f32 %v151, 1.0
    %v201 = vmin.f32 %v152, 1.0
    %v202 = vmin.f32 %v153, 1.0
    %v203 = vmin.f32 %v154, 1.0
    %v204 = vmin.f32 %v155, 1.0
    %v205 = vmin.f32 %v156, 1.0
    %v206 = vmin.f32 %v157, 1.0
    %v207 = vmin.f32 %v158, 1.0
    %v208 = vmin.f32 %v159, 1.0
    %v209 = vmin.f32 %v160, 1.0
    %v210 = vmin.f32 %v161, 1.0
    %v211 = vmin.f32 %v162, 1.0
    %v212 = vmin.f32 %v163, 1.0
    %v213 = vmin.f32 %v164, 1.0
    %v214 = vmin.f32 %v165, 1.0
    %v215 = vmin.f32 %v166, 1.0
    %v216 = vmin.f32 %v167, 1.0
    %v217 = vmin.f32 %v168, 1.0
    %v218 = vmin.f32 %v169, 1.0
    %v219 = vmin.f32 %v170, 1.0
    %v220 = vmin.f32 %v171, 1.0
    %v221 = vmin.f32 %v172, 1.0
    %v222 = vmin.f32 %v173, 1.0
    %v223 = vmul.f32 %v174, 127.0
    %v224 = vmul.f32 %v175, 127.0
    %v225 = vmul.f32 %v176, 127.0
    %v226 = vmul.f32 %v177, 127.0
    %v227 = vmul.f32 %v178, 127.0
    %v228 = vmul.f32 %v179, 127.0
    %v229 = vmul.f32 %v180, 127.0
    %v230 = vmul.f32 %v181, 127.0
    %v231 = vmul.f32 %v182, 127.0
    %v232 = vmul.f32 %v183, 127.0
    %v233 = vmul.f32 %v184, 127.0
    %v234 = vmul.f32 %v185, 127.0
    %v235 = vmul.f32 %v186, 127.0
    %v236 = vmul.f32 %v187, 127.0
    %v237 = vmul.f32 %v188, 127.0
    %v238 = vmul.f32 %v189, 127.0
    %v239 = vmul.f32 %v190, 127.0
    %v240 = vmul.f32 %v191, 127.0
    %v241 = vmul.f32 %v192, 127.0
    %v242 = vmul.f32 %v193, 127.0
    %v243 = vmul.f32 %v194, 127.0
    %v244 = vmul.f32 %v195, 127.0
    %v245 = vmul.f32 %v196, 127.0
    %v246 = vmul.f32 %v197, 127.0
    %v247 = vmul.f32 %v198, 127.0
    %v248 = vmul.f32 %v199, 127.0
    %v249 = vmul.f32 %v200, 127.0
    %v250 = vmul.f32 %v201, 127.0
    %v251 = vmul.f32 %v202, 127.0
    %v252 = vmul.f32 %v203, 127.0
    %v253 = vmul.f32 %v204, 127.0
    %v254 = vmul.f32 %v205, 127.0
    %v255 = vmul.f32 %v206, 127.0
    %v256 = vmul.f32 %v207, 127.0
    %v257 = vmul.f32 %v208, 127.0
    %v258 = vmul.f32 %v209, 127.0
    %v259 = vmul.f32 %v210, 127.0
    %v260 = vmul.f32 %v211, 127.0
    %v261 = vmul.f32 %v212, 127.0
    %v262 = vmul.f32 %v213, 127.0
    %v263 = vmul.f32 %v214, 127.0
    %v264 = vmul.f32 %v215, 127.0
    %v265 = vmul.f32 %v216, 127.0
    %v266 = vmul.f32 %v217, 127.0
    %v267 = vmul.f32 %v218, 127.0
    %v268 = vmul.f32 %v219, 127.0
    %v269 = vmul.f32 %v220, 127.0
    %v270 = vmul.f32 %v221, 127.0
    %v271 = vmul.f32 %v222, 127.0
    %v272 = vround.ne.pseudo %v223
    %v273 = vround.ne.pseudo %v224
    %v274 = vround.ne.pseudo %v225
    %v275 = vround.ne.pseudo %v226
    %v276 = vround.ne.pseudo %v227
    %v277 = vround.ne.pseudo %v228
    %v278 = vround.ne.pseudo %v229
    %v279 = vround.ne.pseudo %v230
    %v280 = vround.ne.pseudo %v231
    %v281 = vround.ne.pseudo %v232
    %v282 = vround.ne.pseudo %v233
    %v283 = vround.ne.pseudo %v234
    %v284 = vround.ne.pseudo %v235
    %v285 = vround.ne.pseudo %v236
    %v286 = vround.ne.pseudo %v237
    %v287 = vround.ne.pseudo %v238
    %v288 = vround.ne.pseudo %v239
    %v289 = vround.ne.pseudo %v240
    %v290 = vround.ne.pseudo %v241
    %v291 = vround.ne.pseudo %v242
    %v292 = vround.ne.pseudo %v243
    %v293 = vround.ne.pseudo %v244
    %v294 = vround.ne.pseudo %v245
    %v295 = vround.ne.pseudo %v246
    %v296 = vround.ne.pseudo %v247
    %v297 = vround.ne.pseudo %v248
    %v298 = vround.ne.pseudo %v249
    %v299 = vround.ne.pseudo %v250
    %v300 = vround.ne.pseudo %v251
    %v301 = vround.ne.pseudo %v252
    %v302 = vround.ne.pseudo %v253
    %v303 = vround.ne.pseudo %v254
    %v304 = vround.ne.pseudo %v255
    %v305 = vround.ne.pseudo %v256
    %v306 = vround.ne.pseudo %v257
    %v307 = vround.ne.pseudo %v258
    %v308 = vround.ne.pseudo %v259
    %v309 = vround.ne.pseudo %v260
    %v310 = vround.ne.pseudo %v261
    %v311 = vround.ne.pseudo %v262
    %v312 = vround.ne.pseudo %v263
    %v313 = vround.ne.pseudo %v264
    %v314 = vround.ne.pseudo %v265
    %v315 = vround.ne.pseudo %v266
    %v316 = vround.ne.pseudo %v267
    %v317 = vround.ne.pseudo %v268
    %v318 = vround.ne.pseudo %v269
    %v319 = vround.ne.pseudo %v270
    %v320 = vround.ne.pseudo %v271
    %v321 = vstv %s25
    %v322 = vmul.f32 %v272, %v321
    %v323 = vmul.f32 %v273, %v321
    %v324 = vmul.f32 %v274, %v321
    %v325 = vmul.f32 %v275, %v321
    %v326 = vmul.f32 %v276, %v321
    %v327 = vmul.f32 %v277, %v321
    %v328 = vmul.f32 %v278, %v321
    %v329 = vmul.f32 %v279, %v321
    %v330 = vmul.f32 %v280, %v321
    %v331 = vmul.f32 %v281, %v321
    %v332 = vmul.f32 %v282, %v321
    %v333 = vmul.f32 %v283, %v321
    %v334 = vmul.f32 %v284, %v321
    %v335 = vmul.f32 %v285, %v321
    %v336 = vmul.f32 %v286, %v321
    %v337 = vmul.f32 %v287, %v321
    %v338 = vmul.f32 %v288, %v321
    %v339 = vmul.f32 %v289, %v321
    %v340 = vmul.f32 %v290, %v321
    %v341 = vmul.f32 %v291, %v321
    %v342 = vmul.f32 %v292, %v321
    %v343 = vmul.f32 %v293, %v321
    %v344 = vmul.f32 %v294, %v321
    %v345 = vmul.f32 %v295, %v321
    %v346 = vmul.f32 %v296, %v321
    %v347 = vmul.f32 %v297, %v321
    %v348 = vmul.f32 %v298, %v321
    %v349 = vmul.f32 %v299, %v321
    %v350 = vmul.f32 %v300, %v321
    %v351 = vmul.f32 %v301, %v321
    %v352 = vmul.f32 %v302, %v321
    %v353 = vmul.f32 %v303, %v321
    %v354 = vmul.f32 %v304, %v321
    %v355 = vmul.f32 %v305, %v321
    %v356 = vmul.f32 %v306, %v321
    %v357 = vmul.f32 %v307, %v321
    %v358 = vmul.f32 %v308, %v321
    %v359 = vmul.f32 %v309, %v321
    %v360 = vmul.f32 %v310, %v321
    %v361 = vmul.f32 %v311, %v321
    %v362 = vmul.f32 %v312, %v321
    %v363 = vmul.f32 %v313, %v321
    %v364 = vmul.f32 %v314, %v321
    %v365 = vmul.f32 %v315, %v321
    %v366 = vmul.f32 %v316, %v321
    %v367 = vmul.f32 %v317, %v321
    %v368 = vmul.f32 %v318, %v321
    %v369 = vmul.f32 %v319, %v321
    %v370 = vmul.f32 %v320, %v321
    %371 = vst [vmem:[%s2] sm:$0xff] %v322
    %372 = vst [vmem:[%s2 + $0x8] sm:$0xff] %v323
    %373 = vst [vmem:[%s2 + $0x10] sm:$0xff] %v324
    %374 = vst [vmem:[%s2 + $0x18] sm:$0xff] %v325
    %375 = vst [vmem:[%s2 + $0x20] sm:$0xff] %v326
    %376 = vst [vmem:[%s2 + $0x28] sm:$0xff] %v327
    %377 = vst [vmem:[%s2 + $0x30] sm:$0xff] %v328
    %378 = vst [vmem:[%s2 + $0x38] sm:$0xff] %v329
    %379 = vst [vmem:[%s2 + $0x40] sm:$0xff] %v330
    %380 = vst [vmem:[%s2 + $0x48] sm:$0xff] %v331
    %381 = vst [vmem:[%s2 + $0x50] sm:$0xff] %v332
    %382 = vst [vmem:[%s2 + $0x58] sm:$0xff] %v333
    %383 = vst [vmem:[%s2 + $0x60] sm:$0xff] %v334
    %384 = vst [vmem:[%s2 + $0x68] sm:$0xff] %v335
    %385 = vst [vmem:[%s2 + $0x70] sm:$0xff] %v336
    %386 = vst [vmem:[%s2 + $0x78] sm:$0xff] %v337
    %387 = vst [vmem:[%s2 + $0x80] sm:$0xff] %v338
    %388 = vst [vmem:[%s2 + $0x88] sm:$0xff] %v339
    %389 = vst [vmem:[%s2 + $0x90] sm:$0xff] %v340
    %390 = vst [vmem:[%s2 + $0x98] sm:$0xff] %v341
    %391 = vst [vmem:[%s2 + $0xa0] sm:$0xff] %v342
    %392 = vst [vmem:[%s2 + $0xa8] sm:$0xff] %v343
    %393 = vst [vmem:[%s2 + $0xb0] sm:$0xff] %v344
    %394 = vst [vmem:[%s2 + $0xb8] sm:$0xff] %v345
    %395 = vst [vmem:[%s2 + $0xc0] sm:$0xff] %v346
    %396 = vst [vmem:[%s2 + $0xc8] sm:$0xff] %v347
    %397 = vst [vmem:[%s2 + $0xd0] sm:$0xff] %v348
    %398 = vst [vmem:[%s2 + $0xd8] sm:$0xff] %v349
    %399 = vst [vmem:[%s2 + $0xe0] sm:$0xff] %v350
    %400 = vst [vmem:[%s2 + $0xe8] sm:$0xff] %v351
    %401 = vst [vmem:[%s2 + $0xf0] sm:$0xff] %v352
    %402 = vst [vmem:[%s2 + $0xf8] sm:$0xff] %v353
    %403 = vst [vmem:[%s2 + $0x100] sm:$0xff] %v354
    %404 = vst [vmem:[%s2 + $0x108] sm:$0xff] %v355
    %405 = vst [vmem:[%s2 + $0x110] sm:$0xff] %v356
    %406 = vst [vmem:[%s2 + $0x118] sm:$0xff] %v357
    %407 = vst [vmem:[%s2 + $0x120] sm:$0xff] %v358
    %408 = vst [vmem:[%s2 + $0x128] sm:$0xff] %v359
    %409 = vst [vmem:[%s2 + $0x130] sm:$0xff] %v360
    %410 = vst [vmem:[%s2 + $0x138] sm:$0xff] %v361
    %411 = vst [vmem:[%s2 + $0x140] sm:$0xff] %v362
    %412 = vst [vmem:[%s2 + $0x148] sm:$0xff] %v363
    %413 = vst [vmem:[%s2 + $0x150] sm:$0xff] %v364
    %414 = vst [vmem:[%s2 + $0x158] sm:$0xff] %v365
    %415 = vst [vmem:[%s2 + $0x160] sm:$0xff] %v366
    %416 = vst [vmem:[%s2 + $0x168] sm:$0xff] %v367
    %417 = vst [vmem:[%s2 + $0x170] sm:$0xff] %v368
    %418 = vst [vmem:[%s2 + $0x178] sm:$0xff] %v369
    %419 = vst [vmem:[%s2 + $0x180] sm:$0xff] %v370
    // Predicated region
    $region14: #{quantize_power_conv2d_forward.5} parent=1 // pred_check
      _
    $region15: #{quantize_power_conv2d_forward.5} parent=1 // pred_check_branch
      %421 = sbr.rel (0) target = $region17
    $region16: #{quantize_power_conv2d_forward.5} parent=1 // pred_region
      _
    $region17: #{quantize_power_conv2d_forward.5} parent=1 // pred_fallthru
      _
    // Predicated region
    $region18: #{quantize_power_conv2d_forward.5} parent=1 // pred_check
      _
    $region19: #{quantize_power_conv2d_forward.5} parent=1 // pred_check_branch
      %423 = sbr.rel (0) target = $region21
    $region20: #{quantize_power_conv2d_forward.5} parent=1 // pred_region
      _
    $region21: #{quantize_power_conv2d_forward.5} parent=1 // pred_fallthru
      _
    %424 = vsyncpa [#allocation3], 1

</llo_original>
